<compile_context>
chip_gen: v7x
topology: tpu7x:2x2x1
jax: 0.10.0
libtpu: 0.0.40
codegen_flags: <defaults>
</compile_context>

<pallas_src>
import functools

import jax
import jax.numpy as jnp
from jax.experimental import pallas as pl
from jax.experimental.pallas import tpu as pltpu


def _node_rnn_kernel(x_ref, dt_ref, w_in_ref, bias_ref, w_cat_ref, b_ode_ref,
                     out_ref, *, n_euler, seq_len):
    """Single-program kernel: the whole recurrence runs in VMEM.

    x_ref     : (S, D)      VMEM  bf16  inputs (row vectors)
    dt_ref    : (S, Hp)     VMEM  f32   per-timestep Euler dt, row-broadcast (row 0 unused)
    w_in_ref  : (D, Hp)     VMEM  bf16  linear_in weight (transposed, lane-padded)
    bias_ref  : (1, Hp)     VMEM  f32   fused bias  b_in + b_hid  (lane-padded)
    w_cat_ref : (Hp, 2*Hp)  VMEM  bf16  [W_ode | W_hid] (transposed, padded) — single MXU RHS
    b_ode_ref : (1, Hp)     VMEM  f32   ODE-func bias (lane-padded)
    out_ref   : (1, Hp)     VMEM  f32   final hidden state (row vector, lane-padded)
    """
    hp = out_ref.shape[1]

    # Hoisted input projection: one batched MXU op replaces S serial matvecs.
    # Padded lanes of w_in / bias are zero, so padded lanes of xw are zero.
    xw = (jnp.dot(x_ref[...], w_in_ref[...], preferred_element_type=jnp.float32)
          + bias_ref[...])                                    # (S, Hp) f32

    b_ode = b_ode_ref[...]                                    # (1, Hp) f32, small

    def rec_dot(h_f32):
        # (1,Hp)@(Hp,2Hp) bf16 dot producing [h@W_ode | h@W_hid] with f32 accumulation.
        # The weight ref is indexed here (per call site) rather than hoisted, so the
        # (Hp,2Hp) weight is not held live in vregs across the unrolled loop.
        return jnp.dot(h_f32.astype(jnp.bfloat16), w_cat_ref[...],
                       preferred_element_type=jnp.float32)    # (1, 2*Hp) f32

    # --- timestep 0: dt == 0 and h0 == 0  ->  Euler solve is identity, h @ W_hid == 0 ---
    h = jnp.tanh(xw[0:1, :])                                  # (1, Hp) f32

    # --- timesteps 1 .. S-1 (fully unrolled, static indices) ---
    for i in range(1, seq_len):
        dt_vec = dt_ref[i:i + 1, :]                           # (1, Hp), precomputed in wrapper

        # ODE solve: N forward-Euler steps of dh/dt = tanh(W_ode h + b_ode)
        for _ in range(n_euler):
            hw = rec_dot(h)
            f = jnp.tanh(hw[:, :hp] + b_ode)                  # ODE half (128-aligned slice)
            h = h + dt_vec * f

        # RNN update: h = tanh(x_i @ W_in + b_in + h @ W_hid + b_hid)  (biases fused in xw)
        hw = rec_dot(h)
        h = jnp.tanh(xw[i:i + 1, :] + hw[:, hp:2 * hp])       # hidden half

    out_ref[...] = h


def node_rnn_forward(x, t, params, n_euler):
    """x: (S, D) f32, t: (S,) f32 -> (H, 1) f32 (PyTorch column layout)."""
    seq_len, in_dim = x.shape
    hidden = params["w_in"].shape[1]
    h_pad = max(128, ((hidden + 127) // 128) * 128)           # lane-dense hidden width
    # NOTE: working set here is ~100 KiB.  If H is ever scaled up, the two (Hp,Hp)
    # recurrent weights grow quadratically — re-derive VMEM residency (v7x: 64 MiB
    # physical) and set pltpu.CompilerParams(vmem_limit_bytes=...) accordingly.

    def pad_cols(a):
        return jnp.pad(a, ((0, 0), (0, h_pad - a.shape[1])))

    def pad_square(a):
        return jnp.pad(a, ((0, h_pad - a.shape[0]), (0, h_pad - a.shape[1])))

    # bf16 MXU operands (f32 accumulation inside the kernel); biases stay f32.
    x_bf = x.astype(jnp.bfloat16)                                       # (S, D)
    w_in_p = pad_cols(params["w_in"]).astype(jnp.bfloat16)              # (D, Hp)
    bias_p = pad_cols(params["b_in"] + params["b_hid"])                 # (1, Hp)  fused bias
    # Concatenated recurrent RHS [W_ode | W_hid]: one constant MXU weight for all matvecs.
    w_cat_p = jnp.concatenate(
        [pad_square(params["w_ode"]), pad_square(params["w_hid"])],
        axis=1).astype(jnp.bfloat16)                                    # (Hp, 2*Hp)
    b_ode_p = pad_cols(params["b_ode"])                                 # (1, Hp)

    # Per-timestep Euler dt, precomputed and row-broadcast (dt[0] unused: step 0 is
    # special-cased since t_prev == t[0] there).
    dts = jnp.concatenate([jnp.zeros((1,), jnp.float32), t[1:] - t[:-1]]) / n_euler
    dt_rows = jnp.broadcast_to(dts[:, None], (seq_len, h_pad)).astype(jnp.float32)

    kernel = functools.partial(_node_rnn_kernel, n_euler=n_euler, seq_len=seq_len)
    vmem = pl.BlockSpec(memory_space=pltpu.MemorySpace.VMEM)

    # Advisory cost hint for XLA's scheduler (latency-bound custom call, tiny bytes).
    flops = (2 * seq_len * in_dim * h_pad
             + 2 * (seq_len - 1) * (n_euler + 1) * h_pad * (2 * h_pad))
    transcendentals = seq_len * h_pad + (seq_len - 1) * n_euler * h_pad
    bytes_accessed = (2 * (x_bf.size + w_in_p.size + w_cat_p.size)
                      + 4 * (bias_p.size + b_ode_p.size + dt_rows.size + h_pad))

    h_row = pl.pallas_call(
        kernel,
        out_shape=jax.ShapeDtypeStruct((1, h_pad), jnp.float32),
        in_specs=[vmem, vmem, vmem, vmem, vmem, vmem],
        out_specs=vmem,
        cost_estimate=pl.CostEstimate(
            flops=flops,
            transcendentals=transcendentals,
            bytes_accessed=bytes_accessed),
    )(x_bf, dt_rows, w_in_p, bias_p, w_cat_p, b_ode_p)

    return h_row[:, :hidden].T                                # (H, 1)


def init_params(key, in_dim, hidden):
    """Deterministic synthetic parameters; weights stored transposed (in, out)."""
    ks = jax.random.split(key, 6)
    scale = 0.1
    return {
        "w_in": scale * jax.random.normal(ks[0], (in_dim, hidden), jnp.float32),
        "b_in": scale * jax.random.normal(ks[1], (1, hidden), jnp.float32),
        "w_hid": scale * jax.random.normal(ks[2], (hidden, hidden), jnp.float32),
        "b_hid": scale * jax.random.normal(ks[3], (1, hidden), jnp.float32),
        "w_ode": scale * jax.random.normal(ks[4], (hidden, hidden), jnp.float32),
        "b_ode": scale * jax.random.normal(ks[5], (1, hidden), jnp.float32),
    }


def node_rnn_reference(x, t, params, n_euler):
    """Pure-JAX f32 reference of the same recurrence (sanity check)."""
    hidden = params["w_in"].shape[1]
    h = jnp.zeros((1, hidden), jnp.float32)
    for i in range(x.shape[0]):
        t_prev = t[i - 1] if i > 0 else t[i]
        dt = (t[i] - t_prev) / n_euler
        for _ in range(n_euler):
            h = h + dt * jnp.tanh(h @ params["w_ode"] + params["b_ode"])
        h = jnp.tanh(x[i:i + 1] @ params["w_in"] + params["b_in"]
                     + h @ params["w_hid"] + params["b_hid"])
    return h.T


if __name__ == "__main__":
    SEQ, IN_DIM, HIDDEN, N_EULER = 8, 16, 32, 4

    key = jax.random.PRNGKey(0)
    k_x, k_p = jax.random.split(key)

    x = jax.random.normal(k_x, (SEQ, IN_DIM), jnp.float32)
    t = jnp.linspace(0.0, 1.0, SEQ, dtype=jnp.float32)
    params = init_params(k_p, IN_DIM, HIDDEN)

    out = node_rnn_forward(x, t, params, N_EULER)
    out = jax.block_until_ready(out)

    ref = node_rnn_reference(x, t, params, N_EULER)
    assert out.shape == (HIDDEN, 1), out.shape
    # bf16 MXU operands with f32 accumulation -> relaxed tolerance vs. the f32 reference.
    assert jnp.allclose(out, ref, atol=3e-2, rtol=3e-2), float(jnp.max(jnp.abs(out - ref)))

    print("KERNEL_OK")
</pallas_src>

<mosaic_0001>
module attributes {stable_mosaic.version = 11 : i64} {
  func.func @_node_rnn_kernel(%arg0: memref<8x16xbf16, #tpu.memory_space<vmem>>, %arg1: memref<8x128xf32, #tpu.memory_space<vmem>>, %arg2: memref<16x128xbf16, #tpu.memory_space<vmem>>, %arg3: memref<1x128xf32, #tpu.memory_space<vmem>>, %arg4: memref<128x256xbf16, #tpu.memory_space<vmem>>, %arg5: memref<1x128xf32, #tpu.memory_space<vmem>>, %arg6: memref<1x128xf32, #tpu.memory_space<vmem>>) attributes {dimension_semantics = [], scalar_prefetch = 0 : i64, scratch_operands = 0 : i64, tpu.core_type = #tpu.core_type<tc>} {
    %c0 = arith.constant 0 : index
    %c0_0 = arith.constant 0 : index
    %0 = vector.load %arg0[%c0, %c0_0] : memref<8x16xbf16, #tpu.memory_space<vmem>>, vector<8x16xbf16>
    %c0_1 = arith.constant 0 : index
    %c0_2 = arith.constant 0 : index
    %1 = vector.load %arg2[%c0_1, %c0_2] : memref<16x128xbf16, #tpu.memory_space<vmem>>, vector<16x128xbf16>
    %cst = arith.constant dense<0.000000e+00> : vector<8x128xf32>
    %2 = tpu.matmul %0, %1, %cst {dimension_numbers = #tpu.dot_dimension_numbers<[1], [0], [0], [1], [0, 0, 1, 1], [], []>} : vector<8x16xbf16>, vector<16x128xbf16>, vector<8x128xf32> -> vector<8x128xf32>
    %c0_3 = arith.constant 0 : index
    %c0_4 = arith.constant 0 : index
    %3 = vector.load %arg3[%c0_3, %c0_4] : memref<1x128xf32, #tpu.memory_space<vmem>>, vector<1x128xf32>
    %4 = vector.broadcast %3 : vector<1x128xf32> to vector<8x128xf32>
    %5 = arith.addf %2, %4 : vector<8x128xf32>
    %c0_5 = arith.constant 0 : index
    %c0_6 = arith.constant 0 : index
    %6 = vector.load %arg5[%c0_5, %c0_6] : memref<1x128xf32, #tpu.memory_space<vmem>>, vector<1x128xf32>
    %7 = vector.extract_strided_slice %5 {offsets = [0, 0], sizes = [1, 128], strides = [1, 1]} : vector<8x128xf32> to vector<1x128xf32>
    %8 = math.tanh %7 : vector<1x128xf32>
    %c1 = arith.constant 1 : index
    %c0_7 = arith.constant 0 : index
    %9 = vector.load %arg1[%c1, %c0_7] : memref<8x128xf32, #tpu.memory_space<vmem>>, vector<1x128xf32>
    %10 = arith.truncf %8 : vector<1x128xf32> to vector<1x128xbf16>
    %c0_8 = arith.constant 0 : index
    %c0_9 = arith.constant 0 : index
    %11 = vector.load %arg4[%c0_8, %c0_9] : memref<128x256xbf16, #tpu.memory_space<vmem>>, vector<128x256xbf16>
    %cst_10 = arith.constant dense<0.000000e+00> : vector<1x256xf32>
    %12 = tpu.matmul %10, %11, %cst_10 {dimension_numbers = #tpu.dot_dimension_numbers<[1], [0], [0], [1], [0, 0, 1, 1], [], []>} : vector<1x128xbf16>, vector<128x256xbf16>, vector<1x256xf32> -> vector<1x256xf32>
    %13 = vector.extract_strided_slice %12 {offsets = [0, 0], sizes = [1, 128], strides = [1, 1]} : vector<1x256xf32> to vector<1x128xf32>
    %14 = arith.addf %13, %6 : vector<1x128xf32>
    %15 = math.tanh %14 : vector<1x128xf32>
    %16 = arith.mulf %9, %15 : vector<1x128xf32>
    %17 = arith.addf %8, %16 : vector<1x128xf32>
    %18 = arith.truncf %17 : vector<1x128xf32> to vector<1x128xbf16>
    %c0_11 = arith.constant 0 : index
    %c0_12 = arith.constant 0 : index
    %19 = vector.load %arg4[%c0_11, %c0_12] : memref<128x256xbf16, #tpu.memory_space<vmem>>, vector<128x256xbf16>
    %cst_13 = arith.constant dense<0.000000e+00> : vector<1x256xf32>
    %20 = tpu.matmul %18, %19, %cst_13 {dimension_numbers = #tpu.dot_dimension_numbers<[1], [0], [0], [1], [0, 0, 1, 1], [], []>} : vector<1x128xbf16>, vector<128x256xbf16>, vector<1x256xf32> -> vector<1x256xf32>
    %21 = vector.extract_strided_slice %20 {offsets = [0, 0], sizes = [1, 128], strides = [1, 1]} : vector<1x256xf32> to vector<1x128xf32>
    %22 = arith.addf %21, %6 : vector<1x128xf32>
    %23 = math.tanh %22 : vector<1x128xf32>
    %24 = arith.mulf %9, %23 : vector<1x128xf32>
    %25 = arith.addf %17, %24 : vector<1x128xf32>
    %26 = arith.truncf %25 : vector<1x128xf32> to vector<1x128xbf16>
    %c0_14 = arith.constant 0 : index
    %c0_15 = arith.constant 0 : index
    %27 = vector.load %arg4[%c0_14, %c0_15] : memref<128x256xbf16, #tpu.memory_space<vmem>>, vector<128x256xbf16>
    %cst_16 = arith.constant dense<0.000000e+00> : vector<1x256xf32>
    %28 = tpu.matmul %26, %27, %cst_16 {dimension_numbers = #tpu.dot_dimension_numbers<[1], [0], [0], [1], [0, 0, 1, 1], [], []>} : vector<1x128xbf16>, vector<128x256xbf16>, vector<1x256xf32> -> vector<1x256xf32>
    %29 = vector.extract_strided_slice %28 {offsets = [0, 0], sizes = [1, 128], strides = [1, 1]} : vector<1x256xf32> to vector<1x128xf32>
    %30 = arith.addf %29, %6 : vector<1x128xf32>
    %31 = math.tanh %30 : vector<1x128xf32>
    %32 = arith.mulf %9, %31 : vector<1x128xf32>
    %33 = arith.addf %25, %32 : vector<1x128xf32>
    %34 = arith.truncf %33 : vector<1x128xf32> to vector<1x128xbf16>
    %c0_17 = arith.constant 0 : index
    %c0_18 = arith.constant 0 : index
    %35 = vector.load %arg4[%c0_17, %c0_18] : memref<128x256xbf16, #tpu.memory_space<vmem>>, vector<128x256xbf16>
    %cst_19 = arith.constant dense<0.000000e+00> : vector<1x256xf32>
    %36 = tpu.matmul %34, %35, %cst_19 {dimension_numbers = #tpu.dot_dimension_numbers<[1], [0], [0], [1], [0, 0, 1, 1], [], []>} : vector<1x128xbf16>, vector<128x256xbf16>, vector<1x256xf32> -> vector<1x256xf32>
    %37 = vector.extract_strided_slice %36 {offsets = [0, 0], sizes = [1, 128], strides = [1, 1]} : vector<1x256xf32> to vector<1x128xf32>
    %38 = arith.addf %37, %6 : vector<1x128xf32>
    %39 = math.tanh %38 : vector<1x128xf32>
    %40 = arith.mulf %9, %39 : vector<1x128xf32>
    %41 = arith.addf %33, %40 : vector<1x128xf32>
    %42 = arith.truncf %41 : vector<1x128xf32> to vector<1x128xbf16>
    %c0_20 = arith.constant 0 : index
    %c0_21 = arith.constant 0 : index
    %43 = vector.load %arg4[%c0_20, %c0_21] : memref<128x256xbf16, #tpu.memory_space<vmem>>, vector<128x256xbf16>
    %cst_22 = arith.constant dense<0.000000e+00> : vector<1x256xf32>
    %44 = tpu.matmul %42, %43, %cst_22 {dimension_numbers = #tpu.dot_dimension_numbers<[1], [0], [0], [1], [0, 0, 1, 1], [], []>} : vector<1x128xbf16>, vector<128x256xbf16>, vector<1x256xf32> -> vector<1x256xf32>
    %45 = vector.extract_strided_slice %5 {offsets = [1, 0], sizes = [1, 128], strides = [1, 1]} : vector<8x128xf32> to vector<1x128xf32>
    %46 = vector.extract_strided_slice %44 {offsets = [0, 128], sizes = [1, 128], strides = [1, 1]} : vector<1x256xf32> to vector<1x128xf32>
    %47 = arith.addf %45, %46 : vector<1x128xf32>
    %48 = math.tanh %47 : vector<1x128xf32>
    %c2 = arith.constant 2 : index
    %c0_23 = arith.constant 0 : index
    %49 = vector.load %arg1[%c2, %c0_23] : memref<8x128xf32, #tpu.memory_space<vmem>>, vector<1x128xf32>
    %50 = arith.truncf %48 : vector<1x128xf32> to vector<1x128xbf16>
    %c0_24 = arith.constant 0 : index
    %c0_25 = arith.constant 0 : index
    %51 = vector.load %arg4[%c0_24, %c0_25] : memref<128x256xbf16, #tpu.memory_space<vmem>>, vector<128x256xbf16>
    %cst_26 = arith.constant dense<0.000000e+00> : vector<1x256xf32>
    %52 = tpu.matmul %50, %51, %cst_26 {dimension_numbers = #tpu.dot_dimension_numbers<[1], [0], [0], [1], [0, 0, 1, 1], [], []>} : vector<1x128xbf16>, vector<128x256xbf16>, vector<1x256xf32> -> vector<1x256xf32>
    %53 = vector.extract_strided_slice %52 {offsets = [0, 0], sizes = [1, 128], strides = [1, 1]} : vector<1x256xf32> to vector<1x128xf32>
    %54 = arith.addf %53, %6 : vector<1x128xf32>
    %55 = math.tanh %54 : vector<1x128xf32>
    %56 = arith.mulf %49, %55 : vector<1x128xf32>
    %57 = arith.addf %48, %56 : vector<1x128xf32>
    %58 = arith.truncf %57 : vector<1x128xf32> to vector<1x128xbf16>
    %c0_27 = arith.constant 0 : index
    %c0_28 = arith.constant 0 : index
    %59 = vector.load %arg4[%c0_27, %c0_28] : memref<128x256xbf16, #tpu.memory_space<vmem>>, vector<128x256xbf16>
    %cst_29 = arith.constant dense<0.000000e+00> : vector<1x256xf32>
    %60 = tpu.matmul %58, %59, %cst_29 {dimension_numbers = #tpu.dot_dimension_numbers<[1], [0], [0], [1], [0, 0, 1, 1], [], []>} : vector<1x128xbf16>, vector<128x256xbf16>, vector<1x256xf32> -> vector<1x256xf32>
    %61 = vector.extract_strided_slice %60 {offsets = [0, 0], sizes = [1, 128], strides = [1, 1]} : vector<1x256xf32> to vector<1x128xf32>
    %62 = arith.addf %61, %6 : vector<1x128xf32>
    %63 = math.tanh %62 : vector<1x128xf32>
    %64 = arith.mulf %49, %63 : vector<1x128xf32>
    %65 = arith.addf %57, %64 : vector<1x128xf32>
    %66 = arith.truncf %65 : vector<1x128xf32> to vector<1x128xbf16>
    %c0_30 = arith.constant 0 : index
    %c0_31 = arith.constant 0 : index
    %67 = vector.load %arg4[%c0_30, %c0_31] : memref<128x256xbf16, #tpu.memory_space<vmem>>, vector<128x256xbf16>
    %cst_32 = arith.constant dense<0.000000e+00> : vector<1x256xf32>
    %68 = tpu.matmul %66, %67, %cst_32 {dimension_numbers = #tpu.dot_dimension_numbers<[1], [0], [0], [1], [0, 0, 1, 1], [], []>} : vector<1x128xbf16>, vector<128x256xbf16>, vector<1x256xf32> -> vector<1x256xf32>
    %69 = vector.extract_strided_slice %68 {offsets = [0, 0], sizes = [1, 128], strides = [1, 1]} : vector<1x256xf32> to vector<1x128xf32>
    %70 = arith.addf %69, %6 : vector<1x128xf32>
    %71 = math.tanh %70 : vector<1x128xf32>
    %72 = arith.mulf %49, %71 : vector<1x128xf32>
    %73 = arith.addf %65, %72 : vector<1x128xf32>
    %74 = arith.truncf %73 : vector<1x128xf32> to vector<1x128xbf16>
    %c0_33 = arith.constant 0 : index
    %c0_34 = arith.constant 0 : index
    %75 = vector.load %arg4[%c0_33, %c0_34] : memref<128x256xbf16, #tpu.memory_space<vmem>>, vector<128x256xbf16>
    %cst_35 = arith.constant dense<0.000000e+00> : vector<1x256xf32>
    %76 = tpu.matmul %74, %75, %cst_35 {dimension_numbers = #tpu.dot_dimension_numbers<[1], [0], [0], [1], [0, 0, 1, 1], [], []>} : vector<1x128xbf16>, vector<128x256xbf16>, vector<1x256xf32> -> vector<1x256xf32>
    %77 = vector.extract_strided_slice %76 {offsets = [0, 0], sizes = [1, 128], strides = [1, 1]} : vector<1x256xf32> to vector<1x128xf32>
    %78 = arith.addf %77, %6 : vector<1x128xf32>
    %79 = math.tanh %78 : vector<1x128xf32>
    %80 = arith.mulf %49, %79 : vector<1x128xf32>
    %81 = arith.addf %73, %80 : vector<1x128xf32>
    %82 = arith.truncf %81 : vector<1x128xf32> to vector<1x128xbf16>
    %c0_36 = arith.constant 0 : index
    %c0_37 = arith.constant 0 : index
    %83 = vector.load %arg4[%c0_36, %c0_37] : memref<128x256xbf16, #tpu.memory_space<vmem>>, vector<128x256xbf16>
    %cst_38 = arith.constant dense<0.000000e+00> : vector<1x256xf32>
    %84 = tpu.matmul %82, %83, %cst_38 {dimension_numbers = #tpu.dot_dimension_numbers<[1], [0], [0], [1], [0, 0, 1, 1], [], []>} : vector<1x128xbf16>, vector<128x256xbf16>, vector<1x256xf32> -> vector<1x256xf32>
    %85 = vector.extract_strided_slice %5 {offsets = [2, 0], sizes = [1, 128], strides = [1, 1]} : vector<8x128xf32> to vector<1x128xf32>
    %86 = vector.extract_strided_slice %84 {offsets = [0, 128], sizes = [1, 128], strides = [1, 1]} : vector<1x256xf32> to vector<1x128xf32>
    %87 = arith.addf %85, %86 : vector<1x128xf32>
    %88 = math.tanh %87 : vector<1x128xf32>
    %c3 = arith.constant 3 : index
    %c0_39 = arith.constant 0 : index
    %89 = vector.load %arg1[%c3, %c0_39] : memref<8x128xf32, #tpu.memory_space<vmem>>, vector<1x128xf32>
    %90 = arith.truncf %88 : vector<1x128xf32> to vector<1x128xbf16>
    %c0_40 = arith.constant 0 : index
    %c0_41 = arith.constant 0 : index
    %91 = vector.load %arg4[%c0_40, %c0_41] : memref<128x256xbf16, #tpu.memory_space<vmem>>, vector<128x256xbf16>
    %cst_42 = arith.constant dense<0.000000e+00> : vector<1x256xf32>
    %92 = tpu.matmul %90, %91, %cst_42 {dimension_numbers = #tpu.dot_dimension_numbers<[1], [0], [0], [1], [0, 0, 1, 1], [], []>} : vector<1x128xbf16>, vector<128x256xbf16>, vector<1x256xf32> -> vector<1x256xf32>
    %93 = vector.extract_strided_slice %92 {offsets = [0, 0], sizes = [1, 128], strides = [1, 1]} : vector<1x256xf32> to vector<1x128xf32>
    %94 = arith.addf %93, %6 : vector<1x128xf32>
    %95 = math.tanh %94 : vector<1x128xf32>
    %96 = arith.mulf %89, %95 : vector<1x128xf32>
    %97 = arith.addf %88, %96 : vector<1x128xf32>
    %98 = arith.truncf %97 : vector<1x128xf32> to vector<1x128xbf16>
    %c0_43 = arith.constant 0 : index
    %c0_44 = arith.constant 0 : index
    %99 = vector.load %arg4[%c0_43, %c0_44] : memref<128x256xbf16, #tpu.memory_space<vmem>>, vector<128x256xbf16>
    %cst_45 = arith.constant dense<0.000000e+00> : vector<1x256xf32>
    %100 = tpu.matmul %98, %99, %cst_45 {dimension_numbers = #tpu.dot_dimension_numbers<[1], [0], [0], [1], [0, 0, 1, 1], [], []>} : vector<1x128xbf16>, vector<128x256xbf16>, vector<1x256xf32> -> vector<1x256xf32>
    %101 = vector.extract_strided_slice %100 {offsets = [0, 0], sizes = [1, 128], strides = [1, 1]} : vector<1x256xf32> to vector<1x128xf32>
    %102 = arith.addf %101, %6 : vector<1x128xf32>
    %103 = math.tanh %102 : vector<1x128xf32>
    %104 = arith.mulf %89, %103 : vector<1x128xf32>
    %105 = arith.addf %97, %104 : vector<1x128xf32>
    %106 = arith.truncf %105 : vector<1x128xf32> to vector<1x128xbf16>
    %c0_46 = arith.constant 0 : index
    %c0_47 = arith.constant 0 : index
    %107 = vector.load %arg4[%c0_46, %c0_47] : memref<128x256xbf16, #tpu.memory_space<vmem>>, vector<128x256xbf16>
    %cst_48 = arith.constant dense<0.000000e+00> : vector<1x256xf32>
    %108 = tpu.matmul %106, %107, %cst_48 {dimension_numbers = #tpu.dot_dimension_numbers<[1], [0], [0], [1], [0, 0, 1, 1], [], []>} : vector<1x128xbf16>, vector<128x256xbf16>, vector<1x256xf32> -> vector<1x256xf32>
    %109 = vector.extract_strided_slice %108 {offsets = [0, 0], sizes = [1, 128], strides = [1, 1]} : vector<1x256xf32> to vector<1x128xf32>
    %110 = arith.addf %109, %6 : vector<1x128xf32>
    %111 = math.tanh %110 : vector<1x128xf32>
    %112 = arith.mulf %89, %111 : vector<1x128xf32>
    %113 = arith.addf %105, %112 : vector<1x128xf32>
    %114 = arith.truncf %113 : vector<1x128xf32> to vector<1x128xbf16>
    %c0_49 = arith.constant 0 : index
    %c0_50 = arith.constant 0 : index
    %115 = vector.load %arg4[%c0_49, %c0_50] : memref<128x256xbf16, #tpu.memory_space<vmem>>, vector<128x256xbf16>
    %cst_51 = arith.constant dense<0.000000e+00> : vector<1x256xf32>
    %116 = tpu.matmul %114, %115, %cst_51 {dimension_numbers = #tpu.dot_dimension_numbers<[1], [0], [0], [1], [0, 0, 1, 1], [], []>} : vector<1x128xbf16>, vector<128x256xbf16>, vector<1x256xf32> -> vector<1x256xf32>
    %117 = vector.extract_strided_slice %116 {offsets = [0, 0], sizes = [1, 128], strides = [1, 1]} : vector<1x256xf32> to vector<1x128xf32>
    %118 = arith.addf %117, %6 : vector<1x128xf32>
    %119 = math.tanh %118 : vector<1x128xf32>
    %120 = arith.mulf %89, %119 : vector<1x128xf32>
    %121 = arith.addf %113, %120 : vector<1x128xf32>
    %122 = arith.truncf %121 : vector<1x128xf32> to vector<1x128xbf16>
    %c0_52 = arith.constant 0 : index
    %c0_53 = arith.constant 0 : index
    %123 = vector.load %arg4[%c0_52, %c0_53] : memref<128x256xbf16, #tpu.memory_space<vmem>>, vector<128x256xbf16>
    %cst_54 = arith.constant dense<0.000000e+00> : vector<1x256xf32>
    %124 = tpu.matmul %122, %123, %cst_54 {dimension_numbers = #tpu.dot_dimension_numbers<[1], [0], [0], [1], [0, 0, 1, 1], [], []>} : vector<1x128xbf16>, vector<128x256xbf16>, vector<1x256xf32> -> vector<1x256xf32>
    %125 = vector.extract_strided_slice %5 {offsets = [3, 0], sizes = [1, 128], strides = [1, 1]} : vector<8x128xf32> to vector<1x128xf32>
    %126 = vector.extract_strided_slice %124 {offsets = [0, 128], sizes = [1, 128], strides = [1, 1]} : vector<1x256xf32> to vector<1x128xf32>
    %127 = arith.addf %125, %126 : vector<1x128xf32>
    %128 = math.tanh %127 : vector<1x128xf32>
    %c4 = arith.constant 4 : index
    %c0_55 = arith.constant 0 : index
    %129 = vector.load %arg1[%c4, %c0_55] : memref<8x128xf32, #tpu.memory_space<vmem>>, vector<1x128xf32>
    %130 = arith.truncf %128 : vector<1x128xf32> to vector<1x128xbf16>
    %c0_56 = arith.constant 0 : index
    %c0_57 = arith.constant 0 : index
    %131 = vector.load %arg4[%c0_56, %c0_57] : memref<128x256xbf16, #tpu.memory_space<vmem>>, vector<128x256xbf16>
    %cst_58 = arith.constant dense<0.000000e+00> : vector<1x256xf32>
    %132 = tpu.matmul %130, %131, %cst_58 {dimension_numbers = #tpu.dot_dimension_numbers<[1], [0], [0], [1], [0, 0, 1, 1], [], []>} : vector<1x128xbf16>, vector<128x256xbf16>, vector<1x256xf32> -> vector<1x256xf32>
    %133 = vector.extract_strided_slice %132 {offsets = [0, 0], sizes = [1, 128], strides = [1, 1]} : vector<1x256xf32> to vector<1x128xf32>
    %134 = arith.addf %133, %6 : vector<1x128xf32>
    %135 = math.tanh %134 : vector<1x128xf32>
    %136 = arith.mulf %129, %135 : vector<1x128xf32>
    %137 = arith.addf %128, %136 : vector<1x128xf32>
    %138 = arith.truncf %137 : vector<1x128xf32> to vector<1x128xbf16>
    %c0_59 = arith.constant 0 : index
    %c0_60 = arith.constant 0 : index
    %139 = vector.load %arg4[%c0_59, %c0_60] : memref<128x256xbf16, #tpu.memory_space<vmem>>, vector<128x256xbf16>
    %cst_61 = arith.constant dense<0.000000e+00> : vector<1x256xf32>
    %140 = tpu.matmul %138, %139, %cst_61 {dimension_numbers = #tpu.dot_dimension_numbers<[1], [0], [0], [1], [0, 0, 1, 1], [], []>} : vector<1x128xbf16>, vector<128x256xbf16>, vector<1x256xf32> -> vector<1x256xf32>
    %141 = vector.extract_strided_slice %140 {offsets = [0, 0], sizes = [1, 128], strides = [1, 1]} : vector<1x256xf32> to vector<1x128xf32>
    %142 = arith.addf %141, %6 : vector<1x128xf32>
    %143 = math.tanh %142 : vector<1x128xf32>
    %144 = arith.mulf %129, %143 : vector<1x128xf32>
    %145 = arith.addf %137, %144 : vector<1x128xf32>
    %146 = arith.truncf %145 : vector<1x128xf32> to vector<1x128xbf16>
    %c0_62 = arith.constant 0 : index
    %c0_63 = arith.constant 0 : index
    %147 = vector.load %arg4[%c0_62, %c0_63] : memref<128x256xbf16, #tpu.memory_space<vmem>>, vector<128x256xbf16>
    %cst_64 = arith.constant dense<0.000000e+00> : vector<1x256xf32>
    %148 = tpu.matmul %146, %147, %cst_64 {dimension_numbers = #tpu.dot_dimension_numbers<[1], [0], [0], [1], [0, 0, 1, 1], [], []>} : vector<1x128xbf16>, vector<128x256xbf16>, vector<1x256xf32> -> vector<1x256xf32>
    %149 = vector.extract_strided_slice %148 {offsets = [0, 0], sizes = [1, 128], strides = [1, 1]} : vector<1x256xf32> to vector<1x128xf32>
    %150 = arith.addf %149, %6 : vector<1x128xf32>
    %151 = math.tanh %150 : vector<1x128xf32>
    %152 = arith.mulf %129, %151 : vector<1x128xf32>
    %153 = arith.addf %145, %152 : vector<1x128xf32>
    %154 = arith.truncf %153 : vector<1x128xf32> to vector<1x128xbf16>
    %c0_65 = arith.constant 0 : index
    %c0_66 = arith.constant 0 : index
    %155 = vector.load %arg4[%c0_65, %c0_66] : memref<128x256xbf16, #tpu.memory_space<vmem>>, vector<128x256xbf16>
    %cst_67 = arith.constant dense<0.000000e+00> : vector<1x256xf32>
    %156 = tpu.matmul %154, %155, %cst_67 {dimension_numbers = #tpu.dot_dimension_numbers<[1], [0], [0], [1], [0, 0, 1, 1], [], []>} : vector<1x128xbf16>, vector<128x256xbf16>, vector<1x256xf32> -> vector<1x256xf32>
    %157 = vector.extract_strided_slice %156 {offsets = [0, 0], sizes = [1, 128], strides = [1, 1]} : vector<1x256xf32> to vector<1x128xf32>
    %158 = arith.addf %157, %6 : vector<1x128xf32>
    %159 = math.tanh %158 : vector<1x128xf32>
    %160 = arith.mulf %129, %159 : vector<1x128xf32>
    %161 = arith.addf %153, %160 : vector<1x128xf32>
    %162 = arith.truncf %161 : vector<1x128xf32> to vector<1x128xbf16>
    %c0_68 = arith.constant 0 : index
    %c0_69 = arith.constant 0 : index
    %163 = vector.load %arg4[%c0_68, %c0_69] : memref<128x256xbf16, #tpu.memory_space<vmem>>, vector<128x256xbf16>
    %cst_70 = arith.constant dense<0.000000e+00> : vector<1x256xf32>
    %164 = tpu.matmul %162, %163, %cst_70 {dimension_numbers = #tpu.dot_dimension_numbers<[1], [0], [0], [1], [0, 0, 1, 1], [], []>} : vector<1x128xbf16>, vector<128x256xbf16>, vector<1x256xf32> -> vector<1x256xf32>
    %165 = vector.extract_strided_slice %5 {offsets = [4, 0], sizes = [1, 128], strides = [1, 1]} : vector<8x128xf32> to vector<1x128xf32>
    %166 = vector.extract_strided_slice %164 {offsets = [0, 128], sizes = [1, 128], strides = [1, 1]} : vector<1x256xf32> to vector<1x128xf32>
    %167 = arith.addf %165, %166 : vector<1x128xf32>
    %168 = math.tanh %167 : vector<1x128xf32>
    %c5 = arith.constant 5 : index
    %c0_71 = arith.constant 0 : index
    %169 = vector.load %arg1[%c5, %c0_71] : memref<8x128xf32, #tpu.memory_space<vmem>>, vector<1x128xf32>
    %170 = arith.truncf %168 : vector<1x128xf32> to vector<1x128xbf16>
    %c0_72 = arith.constant 0 : index
    %c0_73 = arith.constant 0 : index
    %171 = vector.load %arg4[%c0_72, %c0_73] : memref<128x256xbf16, #tpu.memory_space<vmem>>, vector<128x256xbf16>
    %cst_74 = arith.constant dense<0.000000e+00> : vector<1x256xf32>
    %172 = tpu.matmul %170, %171, %cst_74 {dimension_numbers = #tpu.dot_dimension_numbers<[1], [0], [0], [1], [0, 0, 1, 1], [], []>} : vector<1x128xbf16>, vector<128x256xbf16>, vector<1x256xf32> -> vector<1x256xf32>
    %173 = vector.extract_strided_slice %172 {offsets = [0, 0], sizes = [1, 128], strides = [1, 1]} : vector<1x256xf32> to vector<1x128xf32>
    %174 = arith.addf %173, %6 : vector<1x128xf32>
    %175 = math.tanh %174 : vector<1x128xf32>
    %176 = arith.mulf %169, %175 : vector<1x128xf32>
    %177 = arith.addf %168, %176 : vector<1x128xf32>
    %178 = arith.truncf %177 : vector<1x128xf32> to vector<1x128xbf16>
    %c0_75 = arith.constant 0 : index
    %c0_76 = arith.constant 0 : index
    %179 = vector.load %arg4[%c0_75, %c0_76] : memref<128x256xbf16, #tpu.memory_space<vmem>>, vector<128x256xbf16>
    %cst_77 = arith.constant dense<0.000000e+00> : vector<1x256xf32>
    %180 = tpu.matmul %178, %179, %cst_77 {dimension_numbers = #tpu.dot_dimension_numbers<[1], [0], [0], [1], [0, 0, 1, 1], [], []>} : vector<1x128xbf16>, vector<128x256xbf16>, vector<1x256xf32> -> vector<1x256xf32>
    %181 = vector.extract_strided_slice %180 {offsets = [0, 0], sizes = [1, 128], strides = [1, 1]} : vector<1x256xf32> to vector<1x128xf32>
    %182 = arith.addf %181, %6 : vector<1x128xf32>
    %183 = math.tanh %182 : vector<1x128xf32>
    %184 = arith.mulf %169, %183 : vector<1x128xf32>
    %185 = arith.addf %177, %184 : vector<1x128xf32>
    %186 = arith.truncf %185 : vector<1x128xf32> to vector<1x128xbf16>
    %c0_78 = arith.constant 0 : index
    %c0_79 = arith.constant 0 : index
    %187 = vector.load %arg4[%c0_78, %c0_79] : memref<128x256xbf16, #tpu.memory_space<vmem>>, vector<128x256xbf16>
    %cst_80 = arith.constant dense<0.000000e+00> : vector<1x256xf32>
    %188 = tpu.matmul %186, %187, %cst_80 {dimension_numbers = #tpu.dot_dimension_numbers<[1], [0], [0], [1], [0, 0, 1, 1], [], []>} : vector<1x128xbf16>, vector<128x256xbf16>, vector<1x256xf32> -> vector<1x256xf32>
    %189 = vector.extract_strided_slice %188 {offsets = [0, 0], sizes = [1, 128], strides = [1, 1]} : vector<1x256xf32> to vector<1x128xf32>
    %190 = arith.addf %189, %6 : vector<1x128xf32>
    %191 = math.tanh %190 : vector<1x128xf32>
    %192 = arith.mulf %169, %191 : vector<1x128xf32>
    %193 = arith.addf %185, %192 : vector<1x128xf32>
    %194 = arith.truncf %193 : vector<1x128xf32> to vector<1x128xbf16>
    %c0_81 = arith.constant 0 : index
    %c0_82 = arith.constant 0 : index
    %195 = vector.load %arg4[%c0_81, %c0_82] : memref<128x256xbf16, #tpu.memory_space<vmem>>, vector<128x256xbf16>
    %cst_83 = arith.constant dense<0.000000e+00> : vector<1x256xf32>
    %196 = tpu.matmul %194, %195, %cst_83 {dimension_numbers = #tpu.dot_dimension_numbers<[1], [0], [0], [1], [0, 0, 1, 1], [], []>} : vector<1x128xbf16>, vector<128x256xbf16>, vector<1x256xf32> -> vector<1x256xf32>
    %197 = vector.extract_strided_slice %196 {offsets = [0, 0], sizes = [1, 128], strides = [1, 1]} : vector<1x256xf32> to vector<1x128xf32>
    %198 = arith.addf %197, %6 : vector<1x128xf32>
    %199 = math.tanh %198 : vector<1x128xf32>
    %200 = arith.mulf %169, %199 : vector<1x128xf32>
    %201 = arith.addf %193, %200 : vector<1x128xf32>
    %202 = arith.truncf %201 : vector<1x128xf32> to vector<1x128xbf16>
    %c0_84 = arith.constant 0 : index
    %c0_85 = arith.constant 0 : index
    %203 = vector.load %arg4[%c0_84, %c0_85] : memref<128x256xbf16, #tpu.memory_space<vmem>>, vector<128x256xbf16>
    %cst_86 = arith.constant dense<0.000000e+00> : vector<1x256xf32>
    %204 = tpu.matmul %202, %203, %cst_86 {dimension_numbers = #tpu.dot_dimension_numbers<[1], [0], [0], [1], [0, 0, 1, 1], [], []>} : vector<1x128xbf16>, vector<128x256xbf16>, vector<1x256xf32> -> vector<1x256xf32>
    %205 = vector.extract_strided_slice %5 {offsets = [5, 0], sizes = [1, 128], strides = [1, 1]} : vector<8x128xf32> to vector<1x128xf32>
    %206 = vector.extract_strided_slice %204 {offsets = [0, 128], sizes = [1, 128], strides = [1, 1]} : vector<1x256xf32> to vector<1x128xf32>
    %207 = arith.addf %205, %206 : vector<1x128xf32>
    %208 = math.tanh %207 : vector<1x128xf32>
    %c6 = arith.constant 6 : index
    %c0_87 = arith.constant 0 : index
    %209 = vector.load %arg1[%c6, %c0_87] : memref<8x128xf32, #tpu.memory_space<vmem>>, vector<1x128xf32>
    %210 = arith.truncf %208 : vector<1x128xf32> to vector<1x128xbf16>
    %c0_88 = arith.constant 0 : index
    %c0_89 = arith.constant 0 : index
    %211 = vector.load %arg4[%c0_88, %c0_89] : memref<128x256xbf16, #tpu.memory_space<vmem>>, vector<128x256xbf16>
    %cst_90 = arith.constant dense<0.000000e+00> : vector<1x256xf32>
    %212 = tpu.matmul %210, %211, %cst_90 {dimension_numbers = #tpu.dot_dimension_numbers<[1], [0], [0], [1], [0, 0, 1, 1], [], []>} : vector<1x128xbf16>, vector<128x256xbf16>, vector<1x256xf32> -> vector<1x256xf32>
    %213 = vector.extract_strided_slice %212 {offsets = [0, 0], sizes = [1, 128], strides = [1, 1]} : vector<1x256xf32> to vector<1x128xf32>
    %214 = arith.addf %213, %6 : vector<1x128xf32>
    %215 = math.tanh %214 : vector<1x128xf32>
    %216 = arith.mulf %209, %215 : vector<1x128xf32>
    %217 = arith.addf %208, %216 : vector<1x128xf32>
    %218 = arith.truncf %217 : vector<1x128xf32> to vector<1x128xbf16>
    %c0_91 = arith.constant 0 : index
    %c0_92 = arith.constant 0 : index
    %219 = vector.load %arg4[%c0_91, %c0_92] : memref<128x256xbf16, #tpu.memory_space<vmem>>, vector<128x256xbf16>
    %cst_93 = arith.constant dense<0.000000e+00> : vector<1x256xf32>
    %220 = tpu.matmul %218, %219, %cst_93 {dimension_numbers = #tpu.dot_dimension_numbers<[1], [0], [0], [1], [0, 0, 1, 1], [], []>} : vector<1x128xbf16>, vector<128x256xbf16>, vector<1x256xf32> -> vector<1x256xf32>
    %221 = vector.extract_strided_slice %220 {offsets = [0, 0], sizes = [1, 128], strides = [1, 1]} : vector<1x256xf32> to vector<1x128xf32>
    %222 = arith.addf %221, %6 : vector<1x128xf32>
    %223 = math.tanh %222 : vector<1x128xf32>
    %224 = arith.mulf %209, %223 : vector<1x128xf32>
    %225 = arith.addf %217, %224 : vector<1x128xf32>
    %226 = arith.truncf %225 : vector<1x128xf32> to vector<1x128xbf16>
    %c0_94 = arith.constant 0 : index
    %c0_95 = arith.constant 0 : index
    %227 = vector.load %arg4[%c0_94, %c0_95] : memref<128x256xbf16, #tpu.memory_space<vmem>>, vector<128x256xbf16>
    %cst_96 = arith.constant dense<0.000000e+00> : vector<1x256xf32>
    %228 = tpu.matmul %226, %227, %cst_96 {dimension_numbers = #tpu.dot_dimension_numbers<[1], [0], [0], [1], [0, 0, 1, 1], [], []>} : vector<1x128xbf16>, vector<128x256xbf16>, vector<1x256xf32> -> vector<1x256xf32>
    %229 = vector.extract_strided_slice %228 {offsets = [0, 0], sizes = [1, 128], strides = [1, 1]} : vector<1x256xf32> to vector<1x128xf32>
    %230 = arith.addf %229, %6 : vector<1x128xf32>
    %231 = math.tanh %230 : vector<1x128xf32>
    %232 = arith.mulf %209, %231 : vector<1x128xf32>
    %233 = arith.addf %225, %232 : vector<1x128xf32>
    %234 = arith.truncf %233 : vector<1x128xf32> to vector<1x128xbf16>
    %c0_97 = arith.constant 0 : index
    %c0_98 = arith.constant 0 : index
    %235 = vector.load %arg4[%c0_97, %c0_98] : memref<128x256xbf16, #tpu.memory_space<vmem>>, vector<128x256xbf16>
    %cst_99 = arith.constant dense<0.000000e+00> : vector<1x256xf32>
    %236 = tpu.matmul %234, %235, %cst_99 {dimension_numbers = #tpu.dot_dimension_numbers<[1], [0], [0], [1], [0, 0, 1, 1], [], []>} : vector<1x128xbf16>, vector<128x256xbf16>, vector<1x256xf32> -> vector<1x256xf32>
    %237 = vector.extract_strided_slice %236 {offsets = [0, 0], sizes = [1, 128], strides = [1, 1]} : vector<1x256xf32> to vector<1x128xf32>
    %238 = arith.addf %237, %6 : vector<1x128xf32>
    %239 = math.tanh %238 : vector<1x128xf32>
    %240 = arith.mulf %209, %239 : vector<1x128xf32>
    %241 = arith.addf %233, %240 : vector<1x128xf32>
    %242 = arith.truncf %241 : vector<1x128xf32> to vector<1x128xbf16>
    %c0_100 = arith.constant 0 : index
    %c0_101 = arith.constant 0 : index
    %243 = vector.load %arg4[%c0_100, %c0_101] : memref<128x256xbf16, #tpu.memory_space<vmem>>, vector<128x256xbf16>
    %cst_102 = arith.constant dense<0.000000e+00> : vector<1x256xf32>
    %244 = tpu.matmul %242, %243, %cst_102 {dimension_numbers = #tpu.dot_dimension_numbers<[1], [0], [0], [1], [0, 0, 1, 1], [], []>} : vector<1x128xbf16>, vector<128x256xbf16>, vector<1x256xf32> -> vector<1x256xf32>
    %245 = vector.extract_strided_slice %5 {offsets = [6, 0], sizes = [1, 128], strides = [1, 1]} : vector<8x128xf32> to vector<1x128xf32>
    %246 = vector.extract_strided_slice %244 {offsets = [0, 128], sizes = [1, 128], strides = [1, 1]} : vector<1x256xf32> to vector<1x128xf32>
    %247 = arith.addf %245, %246 : vector<1x128xf32>
    %248 = math.tanh %247 : vector<1x128xf32>
    %c7 = arith.constant 7 : index
    %c0_103 = arith.constant 0 : index
    %249 = vector.load %arg1[%c7, %c0_103] : memref<8x128xf32, #tpu.memory_space<vmem>>, vector<1x128xf32>
    %250 = arith.truncf %248 : vector<1x128xf32> to vector<1x128xbf16>
    %c0_104 = arith.constant 0 : index
    %c0_105 = arith.constant 0 : index
    %251 = vector.load %arg4[%c0_104, %c0_105] : memref<128x256xbf16, #tpu.memory_space<vmem>>, vector<128x256xbf16>
    %cst_106 = arith.constant dense<0.000000e+00> : vector<1x256xf32>
    %252 = tpu.matmul %250, %251, %cst_106 {dimension_numbers = #tpu.dot_dimension_numbers<[1], [0], [0], [1], [0, 0, 1, 1], [], []>} : vector<1x128xbf16>, vector<128x256xbf16>, vector<1x256xf32> -> vector<1x256xf32>
    %253 = vector.extract_strided_slice %252 {offsets = [0, 0], sizes = [1, 128], strides = [1, 1]} : vector<1x256xf32> to vector<1x128xf32>
    %254 = arith.addf %253, %6 : vector<1x128xf32>
    %255 = math.tanh %254 : vector<1x128xf32>
    %256 = arith.mulf %249, %255 : vector<1x128xf32>
    %257 = arith.addf %248, %256 : vector<1x128xf32>
    %258 = arith.truncf %257 : vector<1x128xf32> to vector<1x128xbf16>
    %c0_107 = arith.constant 0 : index
    %c0_108 = arith.constant 0 : index
    %259 = vector.load %arg4[%c0_107, %c0_108] : memref<128x256xbf16, #tpu.memory_space<vmem>>, vector<128x256xbf16>
    %cst_109 = arith.constant dense<0.000000e+00> : vector<1x256xf32>
    %260 = tpu.matmul %258, %259, %cst_109 {dimension_numbers = #tpu.dot_dimension_numbers<[1], [0], [0], [1], [0, 0, 1, 1], [], []>} : vector<1x128xbf16>, vector<128x256xbf16>, vector<1x256xf32> -> vector<1x256xf32>
    %261 = vector.extract_strided_slice %260 {offsets = [0, 0], sizes = [1, 128], strides = [1, 1]} : vector<1x256xf32> to vector<1x128xf32>
    %262 = arith.addf %261, %6 : vector<1x128xf32>
    %263 = math.tanh %262 : vector<1x128xf32>
    %264 = arith.mulf %249, %263 : vector<1x128xf32>
    %265 = arith.addf %257, %264 : vector<1x128xf32>
    %266 = arith.truncf %265 : vector<1x128xf32> to vector<1x128xbf16>
    %c0_110 = arith.constant 0 : index
    %c0_111 = arith.constant 0 : index
    %267 = vector.load %arg4[%c0_110, %c0_111] : memref<128x256xbf16, #tpu.memory_space<vmem>>, vector<128x256xbf16>
    %cst_112 = arith.constant dense<0.000000e+00> : vector<1x256xf32>
    %268 = tpu.matmul %266, %267, %cst_112 {dimension_numbers = #tpu.dot_dimension_numbers<[1], [0], [0], [1], [0, 0, 1, 1], [], []>} : vector<1x128xbf16>, vector<128x256xbf16>, vector<1x256xf32> -> vector<1x256xf32>
    %269 = vector.extract_strided_slice %268 {offsets = [0, 0], sizes = [1, 128], strides = [1, 1]} : vector<1x256xf32> to vector<1x128xf32>
    %270 = arith.addf %269, %6 : vector<1x128xf32>
    %271 = math.tanh %270 : vector<1x128xf32>
    %272 = arith.mulf %249, %271 : vector<1x128xf32>
    %273 = arith.addf %265, %272 : vector<1x128xf32>
    %274 = arith.truncf %273 : vector<1x128xf32> to vector<1x128xbf16>
    %c0_113 = arith.constant 0 : index
    %c0_114 = arith.constant 0 : index
    %275 = vector.load %arg4[%c0_113, %c0_114] : memref<128x256xbf16, #tpu.memory_space<vmem>>, vector<128x256xbf16>
    %cst_115 = arith.constant dense<0.000000e+00> : vector<1x256xf32>
    %276 = tpu.matmul %274, %275, %cst_115 {dimension_numbers = #tpu.dot_dimension_numbers<[1], [0], [0], [1], [0, 0, 1, 1], [], []>} : vector<1x128xbf16>, vector<128x256xbf16>, vector<1x256xf32> -> vector<1x256xf32>
    %277 = vector.extract_strided_slice %276 {offsets = [0, 0], sizes = [1, 128], strides = [1, 1]} : vector<1x256xf32> to vector<1x128xf32>
    %278 = arith.addf %277, %6 : vector<1x128xf32>
    %279 = math.tanh %278 : vector<1x128xf32>
    %280 = arith.mulf %249, %279 : vector<1x128xf32>
    %281 = arith.addf %273, %280 : vector<1x128xf32>
    %282 = arith.truncf %281 : vector<1x128xf32> to vector<1x128xbf16>
    %c0_116 = arith.constant 0 : index
    %c0_117 = arith.constant 0 : index
    %283 = vector.load %arg4[%c0_116, %c0_117] : memref<128x256xbf16, #tpu.memory_space<vmem>>, vector<128x256xbf16>
    %cst_118 = arith.constant dense<0.000000e+00> : vector<1x256xf32>
    %284 = tpu.matmul %282, %283, %cst_118 {dimension_numbers = #tpu.dot_dimension_numbers<[1], [0], [0], [1], [0, 0, 1, 1], [], []>} : vector<1x128xbf16>, vector<128x256xbf16>, vector<1x256xf32> -> vector<1x256xf32>
    %285 = vector.extract_strided_slice %5 {offsets = [7, 0], sizes = [1, 128], strides = [1, 1]} : vector<8x128xf32> to vector<1x128xf32>
    %286 = vector.extract_strided_slice %284 {offsets = [0, 128], sizes = [1, 128], strides = [1, 1]} : vector<1x256xf32> to vector<1x128xf32>
    %287 = arith.addf %285, %286 : vector<1x128xf32>
    %288 = math.tanh %287 : vector<1x128xf32>
    %c0_119 = arith.constant 0 : index
    %c0_120 = arith.constant 0 : index
    %289 = vector.load %arg6[%c0_119, %c0_120] : memref<1x128xf32, #tpu.memory_space<vmem>>, vector<1x128xf32>
    tpu.vector_store %arg6[%c0_119, %c0_120], %288 {strides = array<i32>} : memref<1x128xf32, #tpu.memory_space<vmem>>, vector<1x128xf32>,
    return
  }
}

</mosaic_0001>

<llo_original>
// kernel: tpu_custom_call.1
$region0: #{tpu_custom_call.1}
  #allocation0 [shape = 'u32[]', space=smem, size = 0x4, offset = 0x4, fixed_abs, tag = 'smem constant byte address 0x4 - core index']
  #allocation1 [shape = 'u32[144,128]{1,0:T(1,128)}', space=vmem, size = 0x12000, scoped, tag = 'internal scratch']
  %s0 = inlined_call_operand.hbm [shape: bf16[8,16], index: 0, kind: input, shape index: {}]
  %s1 = inlined_call_operand.hbm [shape: f32[8,128], index: 1, kind: input, shape index: {}]
  %s2 = inlined_call_operand.hbm [shape: bf16[16,128], index: 2, kind: input, shape index: {}]
  %s3 = inlined_call_operand.vmem [shape: f32[1,128], index: 3, kind: input, shape index: {}]
  %s4 = inlined_call_operand.hbm [shape: bf16[128,256], index: 4, kind: input, shape index: {}]
  %s5 = inlined_call_operand.vmem [shape: f32[1,128], index: 5, kind: input, shape index: {}]
  %s6 = inlined_call_operand.hbm [shape: f32[1,128], index: 6, kind: output, shape index: {}]
  %s7 = sld [smem:[#allocation0]]
  $region50: #{tpu_custom_call.1} parent=0
    _
  %s9 = ssub.s32 1, %s7
  %s10 = scalar_select 0, %s9, %s7
  $region1: #{tpu_custom_call.1} parent=0
    #allocation2 [shape = 'u8[2048]{0}', space=vmem, size = 0x800, scoped, tag = 'input window, operand 0, single buffered']
    #allocation3 [shape = 's32[1]{0}', space=sflag, size = 0x4, scoped, tag = 'scoped memory for tpu_custom_call.1']
    #allocation4 [shape = 's32[1]{0}', space=sflag, size = 0x4, scoped, tag = 'scoped memory for tpu_custom_call.1']
    #allocation5 [shape = 'u8[4096]{0}', space=vmem, size = 0x1000, scoped, tag = 'input window, operand 1, single buffered']
    #allocation6 [shape = 's32[1]{0}', space=sflag, size = 0x4, scoped, tag = 'scoped memory for tpu_custom_call.1']
    #allocation7 [shape = 'u8[4096]{0}', space=vmem, size = 0x1000, scoped, tag = 'input window, operand 2, single buffered']
    #allocation8 [shape = 'u8[65536]{0}', space=vmem, size = 0x10000, scoped, tag = 'input window, operand 4, single buffered']
    #allocation9 [shape = 's32[1]{0}', space=sflag, size = 0x4, scoped, tag = 'scoped memory for tpu_custom_call.1']
    #allocation10 [shape = 'u8[512]{0}', space=vmem, size = 0x400, scoped, tag = 'output window, operand 0, single buffered']
    %11 = vsyncpa [#allocation3], 0
    %12 = vsyncpa [#allocation6], 0
    %13 = vsyncpa [#allocation9], 0
    %14 = vsyncpa [#allocation4], 0
    // Predicated region
    $region2: #{tpu_custom_call.1} parent=1 // pred_check
      _
    $region3: #{tpu_custom_call.1} parent=1 // pred_check_branch
      %16 = sbr.rel (0) target = $region5
    $region4: #{tpu_custom_call.1} parent=1 // pred_region
      %s18 = ssub.s32 64, 64
      %19 = vsyncadd [#allocation3], %s18
      %s21 = sshll.u32 [#allocation2], 4
      %s22 = int_to_ptr.vmem [resolvable:$true] %s21
      %24 = dma.hbm_to_vmem [thread:$0]  %s0, 64, %s22, [#allocation3]
    $region5: #{tpu_custom_call.1} parent=1 // pred_fallthru
      _
    // Predicated region
    $region6: #{tpu_custom_call.1} parent=1 // pred_check
      _
    $region7: #{tpu_custom_call.1} parent=1 // pred_check_branch
      %26 = sbr.rel (0) target = $region9
    $region8: #{tpu_custom_call.1} parent=1 // pred_region
      %s28 = ssub.s32 128, 128
      %29 = vsyncadd [#allocation6], %s28
      %s31 = sshll.u32 [#allocation5], 4
      %s32 = int_to_ptr.vmem [resolvable:$true] %s31
      %34 = dma.hbm_to_vmem [thread:$0]  %s1, 128, %s32, [#allocation6]
    $region9: #{tpu_custom_call.1} parent=1 // pred_fallthru
      _
    // Predicated region
    $region10: #{tpu_custom_call.1} parent=1 // pred_check
      _
    $region11: #{tpu_custom_call.1} parent=1 // pred_check_branch
      %36 = sbr.rel (0) target = $region13
    $region12: #{tpu_custom_call.1} parent=1 // pred_region
      %s38 = ssub.s32 128, 128
      %39 = vsyncadd [#allocation6], %s38
      %s40 = sshll.u32 [#allocation7], 4
      %s41 = int_to_ptr.vmem [resolvable:$true] %s40
      %46 = dma.hbm_to_vmem [thread:$0]  %s2, 128, %s41, [#allocation6], 64, 64, 4
    $region13: #{tpu_custom_call.1} parent=1 // pred_fallthru
      _
    // Predicated region
    $region14: #{tpu_custom_call.1} parent=1 // pred_check
      _
    $region15: #{tpu_custom_call.1} parent=1 // pred_check_branch
      %48 = sbr.rel (0) target = $region17
    $region16: #{tpu_custom_call.1} parent=1 // pred_region
      _
    $region17: #{tpu_custom_call.1} parent=1 // pred_fallthru
      _
    // Predicated region
    $region18: #{tpu_custom_call.1} parent=1 // pred_check
      _
    $region19: #{tpu_custom_call.1} parent=1 // pred_check_branch
      %50 = sbr.rel (0) target = $region21
    $region20: #{tpu_custom_call.1} parent=1 // pred_region
      %s52 = ssub.s32 2048, 2048
      %53 = vsyncadd [#allocation9], %s52
      %s54 = sshll.u32 [#allocation8], 4
      %s55 = int_to_ptr.vmem [resolvable:$true] %s54
      %60 = dma.hbm_to_vmem [thread:$0]  %s4, 2048, %s55, [#allocation9], 128, 128, 8
    $region21: #{tpu_custom_call.1} parent=1 // pred_fallthru
      _
    // Predicated region
    $region22: #{tpu_custom_call.1} parent=1 // pred_check
      _
    $region23: #{tpu_custom_call.1} parent=1 // pred_check_branch
      %62 = sbr.rel (0) target = $region25
    $region24: #{tpu_custom_call.1} parent=1 // pred_region
      _
    $region25: #{tpu_custom_call.1} parent=1 // pred_fallthru
      _
    // Predicated region
    $region26: #{tpu_custom_call.1} parent=1 // pred_check
      _
    $region27: #{tpu_custom_call.1} parent=1 // pred_check_branch
      %64 = sbr.rel (0) target = $region29
    $region28: #{tpu_custom_call.1} parent=1 // pred_region
      %65 = dma.done [#allocation3], 64
    $region29: #{tpu_custom_call.1} parent=1 // pred_fallthru
      _
    // Predicated region
    $region30: #{tpu_custom_call.1} parent=1 // pred_check
      _
    $region31: #{tpu_custom_call.1} parent=1 // pred_check_branch
      %67 = sbr.rel (0) target = $region33
    $region32: #{tpu_custom_call.1} parent=1 // pred_region
      %68 = dma.done [#allocation6], 128
    $region33: #{tpu_custom_call.1} parent=1 // pred_fallthru
      _
    // Predicated region
    $region34: #{tpu_custom_call.1} parent=1 // pred_check
      _
    $region35: #{tpu_custom_call.1} parent=1 // pred_check_branch
      %70 = sbr.rel (0) target = $region37
    $region36: #{tpu_custom_call.1} parent=1 // pred_region
      %71 = dma.done [#allocation6], 128
    $region37: #{tpu_custom_call.1} parent=1 // pred_fallthru
      _
    // Predicated region
    $region38: #{tpu_custom_call.1} parent=1 // pred_check
      _
    $region39: #{tpu_custom_call.1} parent=1 // pred_check_branch
      %73 = sbr.rel (0) target = $region41
    $region40: #{tpu_custom_call.1} parent=1 // pred_region
      %74 = dma.done [#allocation9], 2048
    $region41: #{tpu_custom_call.1} parent=1 // pred_fallthru
      _
    %v76 = vld [vmem:[#allocation2] sm:$0xf]
    %v77 = vld [vmem:[#allocation7] sm:$0xf]
    %v78 = vld [vmem:[#allocation7 + $0x4] sm:$0xf]
    %v79 = vld [vmem:[%s3] sm:$0x1]
    %v81 = vlaneseq
    %v82 = vshrl.u32 %v81, 7
    %v83 = vsub.s32 0, %v82
    %v84 = vrot.slane %v79, %v83
    %v88 = vunpack.c.l.b16 %v77
    %v89 = vunpack.c.l.b16 %v78
    %v90 = vpack.c.b16 %v89, %v88
    %vm92 = vcmask 130048
    %v94 = vsel %vm92, %v76, 0
    %96 = vmatprep.subr.bf16.mxu0 0
    %97 = vmatpush1.bf16.msra.mxu0 %v90
    %98 = vmatprep.subr.bf16.mxu0 0
    %99 = vmatpush1.bf16.msra.mxu0 0
    %100 = vmatprep.subr.bf16.mxu0 0
    %101 = vmatpush1.bf16.msra.mxu0 0
    %102 = vmatprep.subr.bf16.mxu0 0
    %103 = vmatpush1.bf16.msra.mxu0 0
    %104 = vmatprep.subr.bf16.mxu0 0
    %105 = vmatpush1.bf16.msra.mxu0 0
    %106 = vmatprep.subr.bf16.mxu0 0
    %107 = vmatpush1.bf16.msra.mxu0 0
    %108 = vmatprep.subr.bf16.mxu0 0
    %109 = vmatpush1.bf16.msra.mxu0 0
    %110 = vmatprep.subr.bf16.mxu0 0
    %111 = vmatpush1.bf16.msra.mxu0 0
    %112 = vmatprep.subr.bf16.mxu0 0
    %113 = vmatpush1.bf16.msra.mxu0 0
    %114 = vmatprep.subr.bf16.mxu0 0
    %115 = vmatpush1.bf16.msra.mxu0 0
    %116 = vmatprep.subr.bf16.mxu0 0
    %117 = vmatpush1.bf16.msra.mxu0 0
    %118 = vmatprep.subr.bf16.mxu0 0
    %119 = vmatpush1.bf16.msra.mxu0 0
    %120 = vmatprep.subr.bf16.mxu0 0
    %121 = vmatpush1.bf16.msra.mxu0 0
    %122 = vmatprep.subr.bf16.mxu0 0
    %123 = vmatpush1.bf16.msra.mxu0 0
    %124 = vmatprep.subr.bf16.mxu0 0
    %125 = vmatpush1.bf16.msra.mxu0 0
    %126 = vmatprep.subr.bf16.mxu0 0
    %127 = vmatpush1.bf16.msra.mxu0 0
    %128 = vmatprep.mubr.bf16.mxu0 0
    %129 = vmatmul.mubr.bf16.gmra.mrb[0].mxu0 %v94
    %v130 = vpop.f32.mrb[0].mxu0
    %v131 = vadd.f32 %v84, %v130
    %v132 = vpop.f32.mrb[0].mxu0
    %v133 = vpop.f32.mrb[0].mxu0
    %v134 = vpop.f32.mrb[0].mxu0
    %135 = vdwg.mxu0
    %v136 = vld [vmem:[%s5] sm:$0x1]
    %v137 = vtanh.pop %v131
    %v138 = vld [vmem:[#allocation5 + $0x1] sm:$0x1]
    %v139 = vpack.c.bf16 %v137, %v137
    %v140 = vld [vmem:[#allocation8] sm:$0xff]
    %v141 = vld [vmem:[#allocation8 + $0x8] sm:$0xff]
    %v142 = vld [vmem:[#allocation8 + $0x10] sm:$0xff]
    %v143 = vld [vmem:[#allocation8 + $0x18] sm:$0xff]
    %v144 = vld [vmem:[#allocation8 + $0x20] sm:$0xff]
    %v145 = vld [vmem:[#allocation8 + $0x28] sm:$0xff]
    %v146 = vld [vmem:[#allocation8 + $0x30] sm:$0xff]
    %v147 = vld [vmem:[#allocation8 + $0x38] sm:$0xff]
    %v148 = vld [vmem:[#allocation8 + $0x40] sm:$0xff]
    %v149 = vld [vmem:[#allocation8 + $0x48] sm:$0xff]
    %v150 = vld [vmem:[#allocation8 + $0x50] sm:$0xff]
    %v151 = vld [vmem:[#allocation8 + $0x58] sm:$0xff]
    %v152 = vld [vmem:[#allocation8 + $0x60] sm:$0xff]
    %v153 = vld [vmem:[#allocation8 + $0x68] sm:$0xff]
    %v154 = vld [vmem:[#allocation8 + $0x70] sm:$0xff]
    %v155 = vld [vmem:[#allocation8 + $0x78] sm:$0xff]
    %v172 = vunpack.c.l.b16 %v140
    %v173 = vunpack.c.h.b16 %v140
    %v174 = vunpack.c.l.b16 %v141
    %v175 = vunpack.c.h.b16 %v141
    %v176 = vunpack.c.l.b16 %v142
    %v177 = vunpack.c.h.b16 %v142
    %v178 = vunpack.c.l.b16 %v143
    %v179 = vunpack.c.h.b16 %v143
    %v180 = vunpack.c.l.b16 %v144
    %v181 = vunpack.c.h.b16 %v144
    %v182 = vunpack.c.l.b16 %v145
    %v183 = vunpack.c.h.b16 %v145
    %v184 = vunpack.c.l.b16 %v146
    %v185 = vunpack.c.h.b16 %v146
    %v186 = vunpack.c.l.b16 %v147
    %v187 = vunpack.c.h.b16 %v147
    %v188 = vunpack.c.l.b16 %v148
    %v189 = vunpack.c.h.b16 %v148
    %v190 = vunpack.c.l.b16 %v149
    %v191 = vunpack.c.h.b16 %v149
    %v192 = vunpack.c.l.b16 %v150
    %v193 = vunpack.c.h.b16 %v150
    %v194 = vunpack.c.l.b16 %v151
    %v195 = vunpack.c.h.b16 %v151
    %v196 = vunpack.c.l.b16 %v152
    %v197 = vunpack.c.h.b16 %v152
    %v198 = vunpack.c.l.b16 %v153
    %v199 = vunpack.c.h.b16 %v153
    %v200 = vunpack.c.l.b16 %v154
    %v201 = vunpack.c.h.b16 %v154
    %v202 = vunpack.c.l.b16 %v155
    %v203 = vunpack.c.h.b16 %v155
    %v204 = vpack.c.b16 %v174, %v172
    %v205 = vpack.c.b16 %v175, %v173
    %v206 = vpack.c.b16 %v178, %v176
    %v207 = vpack.c.b16 %v179, %v177
    %v208 = vpack.c.b16 %v182, %v180
    %v209 = vpack.c.b16 %v183, %v181
    %v210 = vpack.c.b16 %v186, %v184
    %v211 = vpack.c.b16 %v187, %v185
    %v212 = vpack.c.b16 %v190, %v188
    %v213 = vpack.c.b16 %v191, %v189
    %v214 = vpack.c.b16 %v194, %v192
    %v215 = vpack.c.b16 %v195, %v193
    %v216 = vpack.c.b16 %v198, %v196
    %v217 = vpack.c.b16 %v199, %v197
    %v218 = vpack.c.b16 %v202, %v200
    %v219 = vpack.c.b16 %v203, %v201
    %236 = vmatprep.subr.bf16.mxu0 %v205
    %237 = vmatpush1.bf16.msra.mxu0 %v204
    %238 = vmatprep.subr.bf16.mxu0 %v207
    %239 = vmatpush1.bf16.msra.mxu0 %v206
    %240 = vmatprep.subr.bf16.mxu0 %v209
    %241 = vmatpush1.bf16.msra.mxu0 %v208
    %242 = vmatprep.subr.bf16.mxu0 %v211
    %243 = vmatpush1.bf16.msra.mxu0 %v210
    %244 = vmatprep.subr.bf16.mxu0 %v213
    %245 = vmatpush1.bf16.msra.mxu0 %v212
    %246 = vmatprep.subr.bf16.mxu0 %v215
    %247 = vmatpush1.bf16.msra.mxu0 %v214
    %248 = vmatprep.subr.bf16.mxu0 %v217
    %249 = vmatpush1.bf16.msra.mxu0 %v216
    %250 = vmatprep.subr.bf16.mxu0 %v219
    %251 = vmatpush1.bf16.msra.mxu0 %v218
    %252 = vmatprep.subr.bf16.mxu0 0
    %253 = vmatpush1.bf16.msra.mxu0 0
    %254 = vmatprep.subr.bf16.mxu0 0
    %255 = vmatpush1.bf16.msra.mxu0 0
    %256 = vmatprep.subr.bf16.mxu0 0
    %257 = vmatpush1.bf16.msra.mxu0 0
    %258 = vmatprep.subr.bf16.mxu0 0
    %259 = vmatpush1.bf16.msra.mxu0 0
    %260 = vmatprep.subr.bf16.mxu0 0
    %261 = vmatpush1.bf16.msra.mxu0 0
    %262 = vmatprep.subr.bf16.mxu0 0
    %263 = vmatpush1.bf16.msra.mxu0 0
    %264 = vmatprep.subr.bf16.mxu0 0
    %265 = vmatpush1.bf16.msra.mxu0 0
    %266 = vmatprep.subr.bf16.mxu0 0
    %267 = vmatpush1.bf16.msra.mxu0 0
    %268 = vmatprep.mubr.bf16.mxu0 0
    %269 = vmatmul.mubr.bf16.gmra.mrb[0].mxu0 %v139
    %v270 = vpop.f32.mrb[0].mxu0
    %v271 = vadd.f32 0.0, %v270
    %v272 = vpop.f32.mrb[0].mxu0
    %v273 = vpop.f32.mrb[0].mxu0
    %v274 = vpop.f32.mrb[0].mxu0
    %275 = vdwg.mxu0
    %v276 = vadd.f32 %v271, %v136
    %v277 = vtanh.pop %v276
    %v278 = vmul.f32 %v138, %v277
    %v279 = vadd.f32 %v137, %v278
    %v280 = vpack.c.bf16 %v279, %v279
    %281 = vmatprep.subr.bf16.mxu0 %v205
    %282 = vmatpush1.bf16.msra.mxu0 %v204
    %283 = vmatprep.subr.bf16.mxu0 %v207
    %284 = vmatpush1.bf16.msra.mxu0 %v206
    %285 = vmatprep.subr.bf16.mxu0 %v209
    %286 = vmatpush1.bf16.msra.mxu0 %v208
    %287 = vmatprep.subr.bf16.mxu0 %v211
    %288 = vmatpush1.bf16.msra.mxu0 %v210
    %289 = vmatprep.subr.bf16.mxu0 %v213
    %290 = vmatpush1.bf16.msra.mxu0 %v212
    %291 = vmatprep.subr.bf16.mxu0 %v215
    %292 = vmatpush1.bf16.msra.mxu0 %v214
    %293 = vmatprep.subr.bf16.mxu0 %v217
    %294 = vmatpush1.bf16.msra.mxu0 %v216
    %295 = vmatprep.subr.bf16.mxu0 %v219
    %296 = vmatpush1.bf16.msra.mxu0 %v218
    %297 = vmatprep.subr.bf16.mxu0 0
    %298 = vmatpush1.bf16.msra.mxu0 0
    %299 = vmatprep.subr.bf16.mxu0 0
    %300 = vmatpush1.bf16.msra.mxu0 0
    %301 = vmatprep.subr.bf16.mxu0 0
    %302 = vmatpush1.bf16.msra.mxu0 0
    %303 = vmatprep.subr.bf16.mxu0 0
    %304 = vmatpush1.bf16.msra.mxu0 0
    %305 = vmatprep.subr.bf16.mxu0 0
    %306 = vmatpush1.bf16.msra.mxu0 0
    %307 = vmatprep.subr.bf16.mxu0 0
    %308 = vmatpush1.bf16.msra.mxu0 0
    %309 = vmatprep.subr.bf16.mxu0 0
    %310 = vmatpush1.bf16.msra.mxu0 0
    %311 = vmatprep.subr.bf16.mxu0 0
    %312 = vmatpush1.bf16.msra.mxu0 0
    %313 = vmatprep.mubr.bf16.mxu0 0
    %314 = vmatmul.mubr.bf16.gmra.mrb[0].mxu0 %v280
    %v315 = vpop.f32.mrb[0].mxu0
    %v316 = vadd.f32 0.0, %v315
    %v317 = vpop.f32.mrb[0].mxu0
    %v318 = vpop.f32.mrb[0].mxu0
    %v319 = vpop.f32.mrb[0].mxu0
    %320 = vdwg.mxu0
    %v321 = vadd.f32 %v316, %v136
    %v322 = vtanh.pop %v321
    %v323 = vmul.f32 %v138, %v322
    %v324 = vadd.f32 %v279, %v323
    %v325 = vpack.c.bf16 %v324, %v324
    %326 = vmatprep.subr.bf16.mxu0 %v205
    %327 = vmatpush1.bf16.msra.mxu0 %v204
    %328 = vmatprep.subr.bf16.mxu0 %v207
    %329 = vmatpush1.bf16.msra.mxu0 %v206
    %330 = vmatprep.subr.bf16.mxu0 %v209
    %331 = vmatpush1.bf16.msra.mxu0 %v208
    %332 = vmatprep.subr.bf16.mxu0 %v211
    %333 = vmatpush1.bf16.msra.mxu0 %v210
    %334 = vmatprep.subr.bf16.mxu0 %v213
    %335 = vmatpush1.bf16.msra.mxu0 %v212
    %336 = vmatprep.subr.bf16.mxu0 %v215
    %337 = vmatpush1.bf16.msra.mxu0 %v214
    %338 = vmatprep.subr.bf16.mxu0 %v217
    %339 = vmatpush1.bf16.msra.mxu0 %v216
    %340 = vmatprep.subr.bf16.mxu0 %v219
    %341 = vmatpush1.bf16.msra.mxu0 %v218
    %342 = vmatprep.subr.bf16.mxu0 0
    %343 = vmatpush1.bf16.msra.mxu0 0
    %344 = vmatprep.subr.bf16.mxu0 0
    %345 = vmatpush1.bf16.msra.mxu0 0
    %346 = vmatprep.subr.bf16.mxu0 0
    %347 = vmatpush1.bf16.msra.mxu0 0
    %348 = vmatprep.subr.bf16.mxu0 0
    %349 = vmatpush1.bf16.msra.mxu0 0
    %350 = vmatprep.subr.bf16.mxu0 0
    %351 = vmatpush1.bf16.msra.mxu0 0
    %352 = vmatprep.subr.bf16.mxu0 0
    %353 = vmatpush1.bf16.msra.mxu0 0
    %354 = vmatprep.subr.bf16.mxu0 0
    %355 = vmatpush1.bf16.msra.mxu0 0
    %356 = vmatprep.subr.bf16.mxu0 0
    %357 = vmatpush1.bf16.msra.mxu0 0
    %358 = vmatprep.mubr.bf16.mxu0 0
    %359 = vmatmul.mubr.bf16.gmra.mrb[0].mxu0 %v325
    %v360 = vpop.f32.mrb[0].mxu0
    %v361 = vadd.f32 0.0, %v360
    %v362 = vpop.f32.mrb[0].mxu0
    %v363 = vpop.f32.mrb[0].mxu0
    %v364 = vpop.f32.mrb[0].mxu0
    %365 = vdwg.mxu0
    %v366 = vadd.f32 %v361, %v136
    %v367 = vtanh.pop %v366
    %v368 = vmul.f32 %v138, %v367
    %v369 = vadd.f32 %v324, %v368
    %v370 = vpack.c.bf16 %v369, %v369
    %371 = vmatprep.subr.bf16.mxu0 %v205
    %372 = vmatpush1.bf16.msra.mxu0 %v204
    %373 = vmatprep.subr.bf16.mxu0 %v207
    %374 = vmatpush1.bf16.msra.mxu0 %v206
    %375 = vmatprep.subr.bf16.mxu0 %v209
    %376 = vmatpush1.bf16.msra.mxu0 %v208
    %377 = vmatprep.subr.bf16.mxu0 %v211
    %378 = vmatpush1.bf16.msra.mxu0 %v210
    %379 = vmatprep.subr.bf16.mxu0 %v213
    %380 = vmatpush1.bf16.msra.mxu0 %v212
    %381 = vmatprep.subr.bf16.mxu0 %v215
    %382 = vmatpush1.bf16.msra.mxu0 %v214
    %383 = vmatprep.subr.bf16.mxu0 %v217
    %384 = vmatpush1.bf16.msra.mxu0 %v216
    %385 = vmatprep.subr.bf16.mxu0 %v219
    %386 = vmatpush1.bf16.msra.mxu0 %v218
    %387 = vmatprep.subr.bf16.mxu0 0
    %388 = vmatpush1.bf16.msra.mxu0 0
    %389 = vmatprep.subr.bf16.mxu0 0
    %390 = vmatpush1.bf16.msra.mxu0 0
    %391 = vmatprep.subr.bf16.mxu0 0
    %392 = vmatpush1.bf16.msra.mxu0 0
    %393 = vmatprep.subr.bf16.mxu0 0
    %394 = vmatpush1.bf16.msra.mxu0 0
    %395 = vmatprep.subr.bf16.mxu0 0
    %396 = vmatpush1.bf16.msra.mxu0 0
    %397 = vmatprep.subr.bf16.mxu0 0
    %398 = vmatpush1.bf16.msra.mxu0 0
    %399 = vmatprep.subr.bf16.mxu0 0
    %400 = vmatpush1.bf16.msra.mxu0 0
    %401 = vmatprep.subr.bf16.mxu0 0
    %402 = vmatpush1.bf16.msra.mxu0 0
    %403 = vmatprep.mubr.bf16.mxu0 0
    %404 = vmatmul.mubr.bf16.gmra.mrb[0].mxu0 %v370
    %v405 = vpop.f32.mrb[0].mxu0
    %v406 = vadd.f32 0.0, %v405
    %v407 = vpop.f32.mrb[0].mxu0
    %v408 = vpop.f32.mrb[0].mxu0
    %v409 = vpop.f32.mrb[0].mxu0
    %410 = vdwg.mxu0
    %v411 = vadd.f32 %v406, %v136
    %v412 = vtanh.pop %v411
    %v413 = vmul.f32 %v138, %v412
    %v414 = vadd.f32 %v369, %v413
    %v415 = vpack.c.bf16 %v414, %v414
    %416 = vmatprep.subr.bf16.mxu0 %v205
    %417 = vmatpush1.bf16.msra.mxu0 %v204
    %418 = vmatprep.subr.bf16.mxu0 %v207
    %419 = vmatpush1.bf16.msra.mxu0 %v206
    %420 = vmatprep.subr.bf16.mxu0 %v209
    %421 = vmatpush1.bf16.msra.mxu0 %v208
    %422 = vmatprep.subr.bf16.mxu0 %v211
    %423 = vmatpush1.bf16.msra.mxu0 %v210
    %424 = vmatprep.subr.bf16.mxu0 %v213
    %425 = vmatpush1.bf16.msra.mxu0 %v212
    %426 = vmatprep.subr.bf16.mxu0 %v215
    %427 = vmatpush1.bf16.msra.mxu0 %v214
    %428 = vmatprep.subr.bf16.mxu0 %v217
    %429 = vmatpush1.bf16.msra.mxu0 %v216
    %430 = vmatprep.subr.bf16.mxu0 %v219
    %431 = vmatpush1.bf16.msra.mxu0 %v218
    %432 = vmatprep.subr.bf16.mxu0 0
    %433 = vmatpush1.bf16.msra.mxu0 0
    %434 = vmatprep.subr.bf16.mxu0 0
    %435 = vmatpush1.bf16.msra.mxu0 0
    %436 = vmatprep.subr.bf16.mxu0 0
    %437 = vmatpush1.bf16.msra.mxu0 0
    %438 = vmatprep.subr.bf16.mxu0 0
    %439 = vmatpush1.bf16.msra.mxu0 0
    %440 = vmatprep.subr.bf16.mxu0 0
    %441 = vmatpush1.bf16.msra.mxu0 0
    %442 = vmatprep.subr.bf16.mxu0 0
    %443 = vmatpush1.bf16.msra.mxu0 0
    %444 = vmatprep.subr.bf16.mxu0 0
    %445 = vmatpush1.bf16.msra.mxu0 0
    %446 = vmatprep.subr.bf16.mxu0 0
    %447 = vmatpush1.bf16.msra.mxu0 0
    %448 = vmatprep.mubr.bf16.mxu0 0
    %449 = vmatmul.mubr.bf16.gmra.mrb[0].mxu0 %v415
    %v450 = vpop.f32.mrb[0].mxu0
    %v451 = vpop.f32.mrb[0].mxu0
    %v452 = vadd.f32 0.0, %v451
    %v453 = vpop.f32.mrb[0].mxu0
    %v454 = vpop.f32.mrb[0].mxu0
    %455 = vdwg.mxu0
    %v457 = vrot.slane %v452, 7
    %v459 = vadd.f32 %v131, %v457
    %v460 = vtanh.pop %v459
    %v461 = vld [vmem:[#allocation5 + $0x2] sm:$0x1]
    %v462 = vpack.c.bf16 %v460, %v460
    %v464 = vshrl.u32 %v462, 16
    %467 = vmatprep.subr.bf16.mxu0 %v205
    %468 = vmatpush1.bf16.msra.mxu0 %v204
    %469 = vmatprep.subr.bf16.mxu0 %v207
    %470 = vmatpush1.bf16.msra.mxu0 %v206
    %471 = vmatprep.subr.bf16.mxu0 %v209
    %472 = vmatpush1.bf16.msra.mxu0 %v208
    %473 = vmatprep.subr.bf16.mxu0 %v211
    %474 = vmatpush1.bf16.msra.mxu0 %v210
    %475 = vmatprep.subr.bf16.mxu0 %v213
    %476 = vmatpush1.bf16.msra.mxu0 %v212
    %477 = vmatprep.subr.bf16.mxu0 %v215
    %478 = vmatpush1.bf16.msra.mxu0 %v214
    %479 = vmatprep.subr.bf16.mxu0 %v217
    %480 = vmatpush1.bf16.msra.mxu0 %v216
    %481 = vmatprep.subr.bf16.mxu0 %v219
    %482 = vmatpush1.bf16.msra.mxu0 %v218
    %483 = vmatprep.subr.bf16.mxu0 0
    %484 = vmatpush1.bf16.msra.mxu0 0
    %485 = vmatprep.subr.bf16.mxu0 0
    %486 = vmatpush1.bf16.msra.mxu0 0
    %487 = vmatprep.subr.bf16.mxu0 0
    %488 = vmatpush1.bf16.msra.mxu0 0
    %489 = vmatprep.subr.bf16.mxu0 0
    %490 = vmatpush1.bf16.msra.mxu0 0
    %491 = vmatprep.subr.bf16.mxu0 0
    %492 = vmatpush1.bf16.msra.mxu0 0
    %493 = vmatprep.subr.bf16.mxu0 0
    %494 = vmatpush1.bf16.msra.mxu0 0
    %495 = vmatprep.subr.bf16.mxu0 0
    %496 = vmatpush1.bf16.msra.mxu0 0
    %497 = vmatprep.subr.bf16.mxu0 0
    %498 = vmatpush1.bf16.msra.mxu0 0
    %499 = vmatprep.mubr.bf16.mxu0 0
    %500 = vmatmul.mubr.bf16.gmra.mrb[0].mxu0 %v464
    %v501 = vpop.f32.mrb[0].mxu0
    %v502 = vadd.f32 0.0, %v501
    %v503 = vpop.f32.mrb[0].mxu0
    %v504 = vpop.f32.mrb[0].mxu0
    %v505 = vpop.f32.mrb[0].mxu0
    %506 = vdwg.mxu0
    %v507 = vadd.f32 %v502, %v136
    %v508 = vtanh.pop %v507
    %v509 = vmul.f32 %v461, %v508
    %v511 = vrot.slane %v509, 7
    %v513 = vadd.f32 %v460, %v511
    %v514 = vpack.c.bf16 %v513, %v513
    %v516 = vshrl.u32 %v514, 16
    %519 = vmatprep.subr.bf16.mxu0 %v205
    %520 = vmatpush1.bf16.msra.mxu0 %v204
    %521 = vmatprep.subr.bf16.mxu0 %v207
    %522 = vmatpush1.bf16.msra.mxu0 %v206
    %523 = vmatprep.subr.bf16.mxu0 %v209
    %524 = vmatpush1.bf16.msra.mxu0 %v208
    %525 = vmatprep.subr.bf16.mxu0 %v211
    %526 = vmatpush1.bf16.msra.mxu0 %v210
    %527 = vmatprep.subr.bf16.mxu0 %v213
    %528 = vmatpush1.bf16.msra.mxu0 %v212
    %529 = vmatprep.subr.bf16.mxu0 %v215
    %530 = vmatpush1.bf16.msra.mxu0 %v214
    %531 = vmatprep.subr.bf16.mxu0 %v217
    %532 = vmatpush1.bf16.msra.mxu0 %v216
    %533 = vmatprep.subr.bf16.mxu0 %v219
    %534 = vmatpush1.bf16.msra.mxu0 %v218
    %535 = vmatprep.subr.bf16.mxu0 0
    %536 = vmatpush1.bf16.msra.mxu0 0
    %537 = vmatprep.subr.bf16.mxu0 0
    %538 = vmatpush1.bf16.msra.mxu0 0
    %539 = vmatprep.subr.bf16.mxu0 0
    %540 = vmatpush1.bf16.msra.mxu0 0
    %541 = vmatprep.subr.bf16.mxu0 0
    %542 = vmatpush1.bf16.msra.mxu0 0
    %543 = vmatprep.subr.bf16.mxu0 0
    %544 = vmatpush1.bf16.msra.mxu0 0
    %545 = vmatprep.subr.bf16.mxu0 0
    %546 = vmatpush1.bf16.msra.mxu0 0
    %547 = vmatprep.subr.bf16.mxu0 0
    %548 = vmatpush1.bf16.msra.mxu0 0
    %549 = vmatprep.subr.bf16.mxu0 0
    %550 = vmatpush1.bf16.msra.mxu0 0
    %551 = vmatprep.mubr.bf16.mxu0 0
    %552 = vmatmul.mubr.bf16.gmra.mrb[0].mxu0 %v516
    %v553 = vpop.f32.mrb[0].mxu0
    %v554 = vadd.f32 0.0, %v553
    %v555 = vpop.f32.mrb[0].mxu0
    %v556 = vpop.f32.mrb[0].mxu0
    %v557 = vpop.f32.mrb[0].mxu0
    %558 = vdwg.mxu0
    %v559 = vadd.f32 %v554, %v136
    %v560 = vtanh.pop %v559
    %v561 = vmul.f32 %v461, %v560
    %v563 = vrot.slane %v561, 7
    %v565 = vadd.f32 %v513, %v563
    %v566 = vpack.c.bf16 %v565, %v565
    %v568 = vshrl.u32 %v566, 16
    %571 = vmatprep.subr.bf16.mxu0 %v205
    %572 = vmatpush1.bf16.msra.mxu0 %v204
    %573 = vmatprep.subr.bf16.mxu0 %v207
    %574 = vmatpush1.bf16.msra.mxu0 %v206
    %575 = vmatprep.subr.bf16.mxu0 %v209
    %576 = vmatpush1.bf16.msra.mxu0 %v208
    %577 = vmatprep.subr.bf16.mxu0 %v211
    %578 = vmatpush1.bf16.msra.mxu0 %v210
    %579 = vmatprep.subr.bf16.mxu0 %v213
    %580 = vmatpush1.bf16.msra.mxu0 %v212
    %581 = vmatprep.subr.bf16.mxu0 %v215
    %582 = vmatpush1.bf16.msra.mxu0 %v214
    %583 = vmatprep.subr.bf16.mxu0 %v217
    %584 = vmatpush1.bf16.msra.mxu0 %v216
    %585 = vmatprep.subr.bf16.mxu0 %v219
    %586 = vmatpush1.bf16.msra.mxu0 %v218
    %587 = vmatprep.subr.bf16.mxu0 0
    %588 = vmatpush1.bf16.msra.mxu0 0
    %589 = vmatprep.subr.bf16.mxu0 0
    %590 = vmatpush1.bf16.msra.mxu0 0
    %591 = vmatprep.subr.bf16.mxu0 0
    %592 = vmatpush1.bf16.msra.mxu0 0
    %593 = vmatprep.subr.bf16.mxu0 0
    %594 = vmatpush1.bf16.msra.mxu0 0
    %595 = vmatprep.subr.bf16.mxu0 0
    %596 = vmatpush1.bf16.msra.mxu0 0
    %597 = vmatprep.subr.bf16.mxu0 0
    %598 = vmatpush1.bf16.msra.mxu0 0
    %599 = vmatprep.subr.bf16.mxu0 0
    %600 = vmatpush1.bf16.msra.mxu0 0
    %601 = vmatprep.subr.bf16.mxu0 0
    %602 = vmatpush1.bf16.msra.mxu0 0
    %603 = vmatprep.mubr.bf16.mxu0 0
    %604 = vmatmul.mubr.bf16.gmra.mrb[0].mxu0 %v568
    %v605 = vpop.f32.mrb[0].mxu0
    %v606 = vadd.f32 0.0, %v605
    %v607 = vpop.f32.mrb[0].mxu0
    %v608 = vpop.f32.mrb[0].mxu0
    %v609 = vpop.f32.mrb[0].mxu0
    %610 = vdwg.mxu0
    %v611 = vadd.f32 %v606, %v136
    %v612 = vtanh.pop %v611
    %v613 = vmul.f32 %v461, %v612
    %v615 = vrot.slane %v613, 7
    %v617 = vadd.f32 %v565, %v615
    %v618 = vpack.c.bf16 %v617, %v617
    %v620 = vshrl.u32 %v618, 16
    %623 = vmatprep.subr.bf16.mxu0 %v205
    %624 = vmatpush1.bf16.msra.mxu0 %v204
    %625 = vmatprep.subr.bf16.mxu0 %v207
    %626 = vmatpush1.bf16.msra.mxu0 %v206
    %627 = vmatprep.subr.bf16.mxu0 %v209
    %628 = vmatpush1.bf16.msra.mxu0 %v208
    %629 = vmatprep.subr.bf16.mxu0 %v211
    %630 = vmatpush1.bf16.msra.mxu0 %v210
    %631 = vmatprep.subr.bf16.mxu0 %v213
    %632 = vmatpush1.bf16.msra.mxu0 %v212
    %633 = vmatprep.subr.bf16.mxu0 %v215
    %634 = vmatpush1.bf16.msra.mxu0 %v214
    %635 = vmatprep.subr.bf16.mxu0 %v217
    %636 = vmatpush1.bf16.msra.mxu0 %v216
    %637 = vmatprep.subr.bf16.mxu0 %v219
    %638 = vmatpush1.bf16.msra.mxu0 %v218
    %639 = vmatprep.subr.bf16.mxu0 0
    %640 = vmatpush1.bf16.msra.mxu0 0
    %641 = vmatprep.subr.bf16.mxu0 0
    %642 = vmatpush1.bf16.msra.mxu0 0
    %643 = vmatprep.subr.bf16.mxu0 0
    %644 = vmatpush1.bf16.msra.mxu0 0
    %645 = vmatprep.subr.bf16.mxu0 0
    %646 = vmatpush1.bf16.msra.mxu0 0
    %647 = vmatprep.subr.bf16.mxu0 0
    %648 = vmatpush1.bf16.msra.mxu0 0
    %649 = vmatprep.subr.bf16.mxu0 0
    %650 = vmatpush1.bf16.msra.mxu0 0
    %651 = vmatprep.subr.bf16.mxu0 0
    %652 = vmatpush1.bf16.msra.mxu0 0
    %653 = vmatprep.subr.bf16.mxu0 0
    %654 = vmatpush1.bf16.msra.mxu0 0
    %655 = vmatprep.mubr.bf16.mxu0 0
    %656 = vmatmul.mubr.bf16.gmra.mrb[0].mxu0 %v620
    %v657 = vpop.f32.mrb[0].mxu0
    %v658 = vadd.f32 0.0, %v657
    %v659 = vpop.f32.mrb[0].mxu0
    %v660 = vpop.f32.mrb[0].mxu0
    %v661 = vpop.f32.mrb[0].mxu0
    %662 = vdwg.mxu0
    %v663 = vadd.f32 %v658, %v136
    %v664 = vtanh.pop %v663
    %v665 = vmul.f32 %v461, %v664
    %v667 = vrot.slane %v665, 7
    %v669 = vadd.f32 %v617, %v667
    %v670 = vpack.c.bf16 %v669, %v669
    %v672 = vshrl.u32 %v670, 16
    %675 = vmatprep.subr.bf16.mxu0 %v205
    %676 = vmatpush1.bf16.msra.mxu0 %v204
    %677 = vmatprep.subr.bf16.mxu0 %v207
    %678 = vmatpush1.bf16.msra.mxu0 %v206
    %679 = vmatprep.subr.bf16.mxu0 %v209
    %680 = vmatpush1.bf16.msra.mxu0 %v208
    %681 = vmatprep.subr.bf16.mxu0 %v211
    %682 = vmatpush1.bf16.msra.mxu0 %v210
    %683 = vmatprep.subr.bf16.mxu0 %v213
    %684 = vmatpush1.bf16.msra.mxu0 %v212
    %685 = vmatprep.subr.bf16.mxu0 %v215
    %686 = vmatpush1.bf16.msra.mxu0 %v214
    %687 = vmatprep.subr.bf16.mxu0 %v217
    %688 = vmatpush1.bf16.msra.mxu0 %v216
    %689 = vmatprep.subr.bf16.mxu0 %v219
    %690 = vmatpush1.bf16.msra.mxu0 %v218
    %691 = vmatprep.subr.bf16.mxu0 0
    %692 = vmatpush1.bf16.msra.mxu0 0
    %693 = vmatprep.subr.bf16.mxu0 0
    %694 = vmatpush1.bf16.msra.mxu0 0
    %695 = vmatprep.subr.bf16.mxu0 0
    %696 = vmatpush1.bf16.msra.mxu0 0
    %697 = vmatprep.subr.bf16.mxu0 0
    %698 = vmatpush1.bf16.msra.mxu0 0
    %699 = vmatprep.subr.bf16.mxu0 0
    %700 = vmatpush1.bf16.msra.mxu0 0
    %701 = vmatprep.subr.bf16.mxu0 0
    %702 = vmatpush1.bf16.msra.mxu0 0
    %703 = vmatprep.subr.bf16.mxu0 0
    %704 = vmatpush1.bf16.msra.mxu0 0
    %705 = vmatprep.subr.bf16.mxu0 0
    %706 = vmatpush1.bf16.msra.mxu0 0
    %707 = vmatprep.mubr.bf16.mxu0 0
    %708 = vmatmul.mubr.bf16.gmra.mrb[0].mxu0 %v672
    %v709 = vpop.f32.mrb[0].mxu0
    %v710 = vpop.f32.mrb[0].mxu0
    %v711 = vadd.f32 0.0, %v710
    %v712 = vpop.f32.mrb[0].mxu0
    %v713 = vpop.f32.mrb[0].mxu0
    %714 = vdwg.mxu0
    %v716 = vrot.slane %v711, 6
    %v718 = vadd.f32 %v131, %v716
    %v719 = vtanh.pop %v718
    %v720 = vld [vmem:[#allocation5 + $0x3] sm:$0x1]
    %v721 = vpack.c.bf16 %v719, %v719
    %v723 = vrot.slane %v721, 1
    %725 = vmatprep.subr.bf16.mxu0 %v205
    %726 = vmatpush1.bf16.msra.mxu0 %v204
    %727 = vmatprep.subr.bf16.mxu0 %v207
    %728 = vmatpush1.bf16.msra.mxu0 %v206
    %729 = vmatprep.subr.bf16.mxu0 %v209
    %730 = vmatpush1.bf16.msra.mxu0 %v208
    %731 = vmatprep.subr.bf16.mxu0 %v211
    %732 = vmatpush1.bf16.msra.mxu0 %v210
    %733 = vmatprep.subr.bf16.mxu0 %v213
    %734 = vmatpush1.bf16.msra.mxu0 %v212
    %735 = vmatprep.subr.bf16.mxu0 %v215
    %736 = vmatpush1.bf16.msra.mxu0 %v214
    %737 = vmatprep.subr.bf16.mxu0 %v217
    %738 = vmatpush1.bf16.msra.mxu0 %v216
    %739 = vmatprep.subr.bf16.mxu0 %v219
    %740 = vmatpush1.bf16.msra.mxu0 %v218
    %741 = vmatprep.subr.bf16.mxu0 0
    %742 = vmatpush1.bf16.msra.mxu0 0
    %743 = vmatprep.subr.bf16.mxu0 0
    %744 = vmatpush1.bf16.msra.mxu0 0
    %745 = vmatprep.subr.bf16.mxu0 0
    %746 = vmatpush1.bf16.msra.mxu0 0
    %747 = vmatprep.subr.bf16.mxu0 0
    %748 = vmatpush1.bf16.msra.mxu0 0
    %749 = vmatprep.subr.bf16.mxu0 0
    %750 = vmatpush1.bf16.msra.mxu0 0
    %751 = vmatprep.subr.bf16.mxu0 0
    %752 = vmatpush1.bf16.msra.mxu0 0
    %753 = vmatprep.subr.bf16.mxu0 0
    %754 = vmatpush1.bf16.msra.mxu0 0
    %755 = vmatprep.subr.bf16.mxu0 0
    %756 = vmatpush1.bf16.msra.mxu0 0
    %757 = vmatprep.mubr.bf16.mxu0 0
    %758 = vmatmul.mubr.bf16.gmra.mrb[0].mxu0 %v723
    %v759 = vpop.f32.mrb[0].mxu0
    %v760 = vadd.f32 0.0, %v759
    %v761 = vpop.f32.mrb[0].mxu0
    %v762 = vpop.f32.mrb[0].mxu0
    %v763 = vpop.f32.mrb[0].mxu0
    %764 = vdwg.mxu0
    %v765 = vadd.f32 %v760, %v136
    %v766 = vtanh.pop %v765
    %v767 = vmul.f32 %v720, %v766
    %v769 = vrot.slane %v767, 6
    %v771 = vadd.f32 %v719, %v769
    %v772 = vpack.c.bf16 %v771, %v771
    %v774 = vrot.slane %v772, 1
    %776 = vmatprep.subr.bf16.mxu0 %v205
    %777 = vmatpush1.bf16.msra.mxu0 %v204
    %778 = vmatprep.subr.bf16.mxu0 %v207
    %779 = vmatpush1.bf16.msra.mxu0 %v206
    %780 = vmatprep.subr.bf16.mxu0 %v209
    %781 = vmatpush1.bf16.msra.mxu0 %v208
    %782 = vmatprep.subr.bf16.mxu0 %v211
    %783 = vmatpush1.bf16.msra.mxu0 %v210
    %784 = vmatprep.subr.bf16.mxu0 %v213
    %785 = vmatpush1.bf16.msra.mxu0 %v212
    %786 = vmatprep.subr.bf16.mxu0 %v215
    %787 = vmatpush1.bf16.msra.mxu0 %v214
    %788 = vmatprep.subr.bf16.mxu0 %v217
    %789 = vmatpush1.bf16.msra.mxu0 %v216
    %790 = vmatprep.subr.bf16.mxu0 %v219
    %791 = vmatpush1.bf16.msra.mxu0 %v218
    %792 = vmatprep.subr.bf16.mxu0 0
    %793 = vmatpush1.bf16.msra.mxu0 0
    %794 = vmatprep.subr.bf16.mxu0 0
    %795 = vmatpush1.bf16.msra.mxu0 0
    %796 = vmatprep.subr.bf16.mxu0 0
    %797 = vmatpush1.bf16.msra.mxu0 0
    %798 = vmatprep.subr.bf16.mxu0 0
    %799 = vmatpush1.bf16.msra.mxu0 0
    %800 = vmatprep.subr.bf16.mxu0 0
    %801 = vmatpush1.bf16.msra.mxu0 0
    %802 = vmatprep.subr.bf16.mxu0 0
    %803 = vmatpush1.bf16.msra.mxu0 0
    %804 = vmatprep.subr.bf16.mxu0 0
    %805 = vmatpush1.bf16.msra.mxu0 0
    %806 = vmatprep.subr.bf16.mxu0 0
    %807 = vmatpush1.bf16.msra.mxu0 0
    %808 = vmatprep.mubr.bf16.mxu0 0
    %809 = vmatmul.mubr.bf16.gmra.mrb[0].mxu0 %v774
    %v810 = vpop.f32.mrb[0].mxu0
    %v811 = vadd.f32 0.0, %v810
    %v812 = vpop.f32.mrb[0].mxu0
    %v813 = vpop.f32.mrb[0].mxu0
    %v814 = vpop.f32.mrb[0].mxu0
    %815 = vdwg.mxu0
    %v816 = vadd.f32 %v811, %v136
    %v817 = vtanh.pop %v816
    %v818 = vmul.f32 %v720, %v817
    %v820 = vrot.slane %v818, 6
    %v822 = vadd.f32 %v771, %v820
    %v823 = vpack.c.bf16 %v822, %v822
    %v825 = vrot.slane %v823, 1
    %827 = vmatprep.subr.bf16.mxu0 %v205
    %828 = vmatpush1.bf16.msra.mxu0 %v204
    %829 = vmatprep.subr.bf16.mxu0 %v207
    %830 = vmatpush1.bf16.msra.mxu0 %v206
    %831 = vmatprep.subr.bf16.mxu0 %v209
    %832 = vmatpush1.bf16.msra.mxu0 %v208
    %833 = vmatprep.subr.bf16.mxu0 %v211
    %834 = vmatpush1.bf16.msra.mxu0 %v210
    %835 = vmatprep.subr.bf16.mxu0 %v213
    %836 = vmatpush1.bf16.msra.mxu0 %v212
    %837 = vmatprep.subr.bf16.mxu0 %v215
    %838 = vmatpush1.bf16.msra.mxu0 %v214
    %839 = vmatprep.subr.bf16.mxu0 %v217
    %840 = vmatpush1.bf16.msra.mxu0 %v216
    %841 = vmatprep.subr.bf16.mxu0 %v219
    %842 = vmatpush1.bf16.msra.mxu0 %v218
    %843 = vmatprep.subr.bf16.mxu0 0
    %844 = vmatpush1.bf16.msra.mxu0 0
    %845 = vmatprep.subr.bf16.mxu0 0
    %846 = vmatpush1.bf16.msra.mxu0 0
    %847 = vmatprep.subr.bf16.mxu0 0
    %848 = vmatpush1.bf16.msra.mxu0 0
    %849 = vmatprep.subr.bf16.mxu0 0
    %850 = vmatpush1.bf16.msra.mxu0 0
    %851 = vmatprep.subr.bf16.mxu0 0
    %852 = vmatpush1.bf16.msra.mxu0 0
    %853 = vmatprep.subr.bf16.mxu0 0
    %854 = vmatpush1.bf16.msra.mxu0 0
    %855 = vmatprep.subr.bf16.mxu0 0
    %856 = vmatpush1.bf16.msra.mxu0 0
    %857 = vmatprep.subr.bf16.mxu0 0
    %858 = vmatpush1.bf16.msra.mxu0 0
    %859 = vmatprep.mubr.bf16.mxu0 0
    %860 = vmatmul.mubr.bf16.gmra.mrb[0].mxu0 %v825
    %v861 = vpop.f32.mrb[0].mxu0
    %v862 = vadd.f32 0.0, %v861
    %v863 = vpop.f32.mrb[0].mxu0
    %v864 = vpop.f32.mrb[0].mxu0
    %v865 = vpop.f32.mrb[0].mxu0
    %866 = vdwg.mxu0
    %v867 = vadd.f32 %v862, %v136
    %v868 = vtanh.pop %v867
    %v869 = vmul.f32 %v720, %v868
    %v871 = vrot.slane %v869, 6
    %v873 = vadd.f32 %v822, %v871
    %v874 = vpack.c.bf16 %v873, %v873
    %v876 = vrot.slane %v874, 1
    %878 = vmatprep.subr.bf16.mxu0 %v205
    %879 = vmatpush1.bf16.msra.mxu0 %v204
    %880 = vmatprep.subr.bf16.mxu0 %v207
    %881 = vmatpush1.bf16.msra.mxu0 %v206
    %882 = vmatprep.subr.bf16.mxu0 %v209
    %883 = vmatpush1.bf16.msra.mxu0 %v208
    %884 = vmatprep.subr.bf16.mxu0 %v211
    %885 = vmatpush1.bf16.msra.mxu0 %v210
    %886 = vmatprep.subr.bf16.mxu0 %v213
    %887 = vmatpush1.bf16.msra.mxu0 %v212
    %888 = vmatprep.subr.bf16.mxu0 %v215
    %889 = vmatpush1.bf16.msra.mxu0 %v214
    %890 = vmatprep.subr.bf16.mxu0 %v217
    %891 = vmatpush1.bf16.msra.mxu0 %v216
    %892 = vmatprep.subr.bf16.mxu0 %v219
    %893 = vmatpush1.bf16.msra.mxu0 %v218
    %894 = vmatprep.subr.bf16.mxu0 0
    %895 = vmatpush1.bf16.msra.mxu0 0
    %896 = vmatprep.subr.bf16.mxu0 0
    %897 = vmatpush1.bf16.msra.mxu0 0
    %898 = vmatprep.subr.bf16.mxu0 0
    %899 = vmatpush1.bf16.msra.mxu0 0
    %900 = vmatprep.subr.bf16.mxu0 0
    %901 = vmatpush1.bf16.msra.mxu0 0
    %902 = vmatprep.subr.bf16.mxu0 0
    %903 = vmatpush1.bf16.msra.mxu0 0
    %904 = vmatprep.subr.bf16.mxu0 0
    %905 = vmatpush1.bf16.msra.mxu0 0
    %906 = vmatprep.subr.bf16.mxu0 0
    %907 = vmatpush1.bf16.msra.mxu0 0
    %908 = vmatprep.subr.bf16.mxu0 0
    %909 = vmatpush1.bf16.msra.mxu0 0
    %910 = vmatprep.mubr.bf16.mxu0 0
    %911 = vmatmul.mubr.bf16.gmra.mrb[0].mxu0 %v876
    %v912 = vpop.f32.mrb[0].mxu0
    %v913 = vadd.f32 0.0, %v912
    %v914 = vpop.f32.mrb[0].mxu0
    %v915 = vpop.f32.mrb[0].mxu0
    %v916 = vpop.f32.mrb[0].mxu0
    %917 = vdwg.mxu0
    %v918 = vadd.f32 %v913, %v136
    %v919 = vtanh.pop %v918
    %v920 = vmul.f32 %v720, %v919
    %v922 = vrot.slane %v920, 6
    %v924 = vadd.f32 %v873, %v922
    %v925 = vpack.c.bf16 %v924, %v924
    %v927 = vrot.slane %v925, 1
    %929 = vmatprep.subr.bf16.mxu0 %v205
    %930 = vmatpush1.bf16.msra.mxu0 %v204
    %931 = vmatprep.subr.bf16.mxu0 %v207
    %932 = vmatpush1.bf16.msra.mxu0 %v206
    %933 = vmatprep.subr.bf16.mxu0 %v209
    %934 = vmatpush1.bf16.msra.mxu0 %v208
    %935 = vmatprep.subr.bf16.mxu0 %v211
    %936 = vmatpush1.bf16.msra.mxu0 %v210
    %937 = vmatprep.subr.bf16.mxu0 %v213
    %938 = vmatpush1.bf16.msra.mxu0 %v212
    %939 = vmatprep.subr.bf16.mxu0 %v215
    %940 = vmatpush1.bf16.msra.mxu0 %v214
    %941 = vmatprep.subr.bf16.mxu0 %v217
    %942 = vmatpush1.bf16.msra.mxu0 %v216
    %943 = vmatprep.subr.bf16.mxu0 %v219
    %944 = vmatpush1.bf16.msra.mxu0 %v218
    %945 = vmatprep.subr.bf16.mxu0 0
    %946 = vmatpush1.bf16.msra.mxu0 0
    %947 = vmatprep.subr.bf16.mxu0 0
    %948 = vmatpush1.bf16.msra.mxu0 0
    %949 = vmatprep.subr.bf16.mxu0 0
    %950 = vmatpush1.bf16.msra.mxu0 0
    %951 = vmatprep.subr.bf16.mxu0 0
    %952 = vmatpush1.bf16.msra.mxu0 0
    %953 = vmatprep.subr.bf16.mxu0 0
    %954 = vmatpush1.bf16.msra.mxu0 0
    %955 = vmatprep.subr.bf16.mxu0 0
    %956 = vmatpush1.bf16.msra.mxu0 0
    %957 = vmatprep.subr.bf16.mxu0 0
    %958 = vmatpush1.bf16.msra.mxu0 0
    %959 = vmatprep.subr.bf16.mxu0 0
    %960 = vmatpush1.bf16.msra.mxu0 0
    %961 = vmatprep.mubr.bf16.mxu0 0
    %962 = vmatmul.mubr.bf16.gmra.mrb[0].mxu0 %v927
    %v963 = vpop.f32.mrb[0].mxu0
    %v964 = vpop.f32.mrb[0].mxu0
    %v965 = vadd.f32 0.0, %v964
    %v966 = vpop.f32.mrb[0].mxu0
    %v967 = vpop.f32.mrb[0].mxu0
    %968 = vdwg.mxu0
    %v970 = vrot.slane %v965, 5
    %v972 = vadd.f32 %v131, %v970
    %v973 = vtanh.pop %v972
    %v974 = vld [vmem:[#allocation5 + $0x4] sm:$0x1]
    %v975 = vpack.c.bf16 %v973, %v973
    %v977 = vshrl.u32 %v975, 16
    %v979 = vrot.slane %v977, 1
    %981 = vmatprep.subr.bf16.mxu0 %v205
    %982 = vmatpush1.bf16.msra.mxu0 %v204
    %983 = vmatprep.subr.bf16.mxu0 %v207
    %984 = vmatpush1.bf16.msra.mxu0 %v206
    %985 = vmatprep.subr.bf16.mxu0 %v209
    %986 = vmatpush1.bf16.msra.mxu0 %v208
    %987 = vmatprep.subr.bf16.mxu0 %v211
    %988 = vmatpush1.bf16.msra.mxu0 %v210
    %989 = vmatprep.subr.bf16.mxu0 %v213
    %990 = vmatpush1.bf16.msra.mxu0 %v212
    %991 = vmatprep.subr.bf16.mxu0 %v215
    %992 = vmatpush1.bf16.msra.mxu0 %v214
    %993 = vmatprep.subr.bf16.mxu0 %v217
    %994 = vmatpush1.bf16.msra.mxu0 %v216
    %995 = vmatprep.subr.bf16.mxu0 %v219
    %996 = vmatpush1.bf16.msra.mxu0 %v218
    %997 = vmatprep.subr.bf16.mxu0 0
    %998 = vmatpush1.bf16.msra.mxu0 0
    %999 = vmatprep.subr.bf16.mxu0 0
    %1000 = vmatpush1.bf16.msra.mxu0 0
    %1001 = vmatprep.subr.bf16.mxu0 0
    %1002 = vmatpush1.bf16.msra.mxu0 0
    %1003 = vmatprep.subr.bf16.mxu0 0
    %1004 = vmatpush1.bf16.msra.mxu0 0
    %1005 = vmatprep.subr.bf16.mxu0 0
    %1006 = vmatpush1.bf16.msra.mxu0 0
    %1007 = vmatprep.subr.bf16.mxu0 0
    %1008 = vmatpush1.bf16.msra.mxu0 0
    %1009 = vmatprep.subr.bf16.mxu0 0
    %1010 = vmatpush1.bf16.msra.mxu0 0
    %1011 = vmatprep.subr.bf16.mxu0 0
    %1012 = vmatpush1.bf16.msra.mxu0 0
    %1013 = vmatprep.mubr.bf16.mxu0 0
    %1014 = vmatmul.mubr.bf16.gmra.mrb[0].mxu0 %v979
    %v1015 = vpop.f32.mrb[0].mxu0
    %v1016 = vadd.f32 0.0, %v1015
    %v1017 = vpop.f32.mrb[0].mxu0
    %v1018 = vpop.f32.mrb[0].mxu0
    %v1019 = vpop.f32.mrb[0].mxu0
    %1020 = vdwg.mxu0
    %v1021 = vadd.f32 %v1016, %v136
    %v1022 = vtanh.pop %v1021
    %v1023 = vmul.f32 %v974, %v1022
    %v1025 = vrot.slane %v1023, 5
    %v1027 = vadd.f32 %v973, %v1025
    %v1028 = vpack.c.bf16 %v1027, %v1027
    %v1030 = vshrl.u32 %v1028, 16
    %v1032 = vrot.slane %v1030, 1
    %1034 = vmatprep.subr.bf16.mxu0 %v205
    %1035 = vmatpush1.bf16.msra.mxu0 %v204
    %1036 = vmatprep.subr.bf16.mxu0 %v207
    %1037 = vmatpush1.bf16.msra.mxu0 %v206
    %1038 = vmatprep.subr.bf16.mxu0 %v209
    %1039 = vmatpush1.bf16.msra.mxu0 %v208
    %1040 = vmatprep.subr.bf16.mxu0 %v211
    %1041 = vmatpush1.bf16.msra.mxu0 %v210
    %1042 = vmatprep.subr.bf16.mxu0 %v213
    %1043 = vmatpush1.bf16.msra.mxu0 %v212
    %1044 = vmatprep.subr.bf16.mxu0 %v215
    %1045 = vmatpush1.bf16.msra.mxu0 %v214
    %1046 = vmatprep.subr.bf16.mxu0 %v217
    %1047 = vmatpush1.bf16.msra.mxu0 %v216
    %1048 = vmatprep.subr.bf16.mxu0 %v219
    %1049 = vmatpush1.bf16.msra.mxu0 %v218
    %1050 = vmatprep.subr.bf16.mxu0 0
    %1051 = vmatpush1.bf16.msra.mxu0 0
    %1052 = vmatprep.subr.bf16.mxu0 0
    %1053 = vmatpush1.bf16.msra.mxu0 0
    %1054 = vmatprep.subr.bf16.mxu0 0
    %1055 = vmatpush1.bf16.msra.mxu0 0
    %1056 = vmatprep.subr.bf16.mxu0 0
    %1057 = vmatpush1.bf16.msra.mxu0 0
    %1058 = vmatprep.subr.bf16.mxu0 0
    %1059 = vmatpush1.bf16.msra.mxu0 0
    %1060 = vmatprep.subr.bf16.mxu0 0
    %1061 = vmatpush1.bf16.msra.mxu0 0
    %1062 = vmatprep.subr.bf16.mxu0 0
    %1063 = vmatpush1.bf16.msra.mxu0 0
    %1064 = vmatprep.subr.bf16.mxu0 0
    %1065 = vmatpush1.bf16.msra.mxu0 0
    %1066 = vmatprep.mubr.bf16.mxu0 0
    %1067 = vmatmul.mubr.bf16.gmra.mrb[0].mxu0 %v1032
    %v1068 = vpop.f32.mrb[0].mxu0
    %v1069 = vadd.f32 0.0, %v1068
    %v1070 = vpop.f32.mrb[0].mxu0
    %v1071 = vpop.f32.mrb[0].mxu0
    %v1072 = vpop.f32.mrb[0].mxu0
    %1073 = vdwg.mxu0
    %v1074 = vadd.f32 %v1069, %v136
    %v1075 = vtanh.pop %v1074
    %v1076 = vmul.f32 %v974, %v1075
    %v1078 = vrot.slane %v1076, 5
    %v1080 = vadd.f32 %v1027, %v1078
    %v1081 = vpack.c.bf16 %v1080, %v1080
    %v1083 = vshrl.u32 %v1081, 16
    %v1085 = vrot.slane %v1083, 1
    %1087 = vmatprep.subr.bf16.mxu0 %v205
    %1088 = vmatpush1.bf16.msra.mxu0 %v204
    %1089 = vmatprep.subr.bf16.mxu0 %v207
    %1090 = vmatpush1.bf16.msra.mxu0 %v206
    %1091 = vmatprep.subr.bf16.mxu0 %v209
    %1092 = vmatpush1.bf16.msra.mxu0 %v208
    %1093 = vmatprep.subr.bf16.mxu0 %v211
    %1094 = vmatpush1.bf16.msra.mxu0 %v210
    %1095 = vmatprep.subr.bf16.mxu0 %v213
    %1096 = vmatpush1.bf16.msra.mxu0 %v212
    %1097 = vmatprep.subr.bf16.mxu0 %v215
    %1098 = vmatpush1.bf16.msra.mxu0 %v214
    %1099 = vmatprep.subr.bf16.mxu0 %v217
    %1100 = vmatpush1.bf16.msra.mxu0 %v216
    %1101 = vmatprep.subr.bf16.mxu0 %v219
    %1102 = vmatpush1.bf16.msra.mxu0 %v218
    %1103 = vmatprep.subr.bf16.mxu0 0
    %1104 = vmatpush1.bf16.msra.mxu0 0
    %1105 = vmatprep.subr.bf16.mxu0 0
    %1106 = vmatpush1.bf16.msra.mxu0 0
    %1107 = vmatprep.subr.bf16.mxu0 0
    %1108 = vmatpush1.bf16.msra.mxu0 0
    %1109 = vmatprep.subr.bf16.mxu0 0
    %1110 = vmatpush1.bf16.msra.mxu0 0
    %1111 = vmatprep.subr.bf16.mxu0 0
    %1112 = vmatpush1.bf16.msra.mxu0 0
    %1113 = vmatprep.subr.bf16.mxu0 0
    %1114 = vmatpush1.bf16.msra.mxu0 0
    %1115 = vmatprep.subr.bf16.mxu0 0
    %1116 = vmatpush1.bf16.msra.mxu0 0
    %1117 = vmatprep.subr.bf16.mxu0 0
    %1118 = vmatpush1.bf16.msra.mxu0 0
    %1119 = vmatprep.mubr.bf16.mxu0 0
    %1120 = vmatmul.mubr.bf16.gmra.mrb[0].mxu0 %v1085
    %v1121 = vpop.f32.mrb[0].mxu0
    %v1122 = vadd.f32 0.0, %v1121
    %v1123 = vpop.f32.mrb[0].mxu0
    %v1124 = vpop.f32.mrb[0].mxu0
    %v1125 = vpop.f32.mrb[0].mxu0
    %1126 = vdwg.mxu0
    %v1127 = vadd.f32 %v1122, %v136
    %v1128 = vtanh.pop %v1127
    %v1129 = vmul.f32 %v974, %v1128
    %v1131 = vrot.slane %v1129, 5
    %v1133 = vadd.f32 %v1080, %v1131
    %v1134 = vpack.c.bf16 %v1133, %v1133
    %v1136 = vshrl.u32 %v1134, 16
    %v1138 = vrot.slane %v1136, 1
    %1140 = vmatprep.subr.bf16.mxu0 %v205
    %1141 = vmatpush1.bf16.msra.mxu0 %v204
    %1142 = vmatprep.subr.bf16.mxu0 %v207
    %1143 = vmatpush1.bf16.msra.mxu0 %v206
    %1144 = vmatprep.subr.bf16.mxu0 %v209
    %1145 = vmatpush1.bf16.msra.mxu0 %v208
    %1146 = vmatprep.subr.bf16.mxu0 %v211
    %1147 = vmatpush1.bf16.msra.mxu0 %v210
    %1148 = vmatprep.subr.bf16.mxu0 %v213
    %1149 = vmatpush1.bf16.msra.mxu0 %v212
    %1150 = vmatprep.subr.bf16.mxu0 %v215
    %1151 = vmatpush1.bf16.msra.mxu0 %v214
    %1152 = vmatprep.subr.bf16.mxu0 %v217
    %1153 = vmatpush1.bf16.msra.mxu0 %v216
    %1154 = vmatprep.subr.bf16.mxu0 %v219
    %1155 = vmatpush1.bf16.msra.mxu0 %v218
    %1156 = vmatprep.subr.bf16.mxu0 0
    %1157 = vmatpush1.bf16.msra.mxu0 0
    %1158 = vmatprep.subr.bf16.mxu0 0
    %1159 = vmatpush1.bf16.msra.mxu0 0
    %1160 = vmatprep.subr.bf16.mxu0 0
    %1161 = vmatpush1.bf16.msra.mxu0 0
    %1162 = vmatprep.subr.bf16.mxu0 0
    %1163 = vmatpush1.bf16.msra.mxu0 0
    %1164 = vmatprep.subr.bf16.mxu0 0
    %1165 = vmatpush1.bf16.msra.mxu0 0
    %1166 = vmatprep.subr.bf16.mxu0 0
    %1167 = vmatpush1.bf16.msra.mxu0 0
    %1168 = vmatprep.subr.bf16.mxu0 0
    %1169 = vmatpush1.bf16.msra.mxu0 0
    %1170 = vmatprep.subr.bf16.mxu0 0
    %1171 = vmatpush1.bf16.msra.mxu0 0
    %1172 = vmatprep.mubr.bf16.mxu0 0
    %1173 = vmatmul.mubr.bf16.gmra.mrb[0].mxu0 %v1138
    %v1174 = vpop.f32.mrb[0].mxu0
    %v1175 = vadd.f32 0.0, %v1174
    %v1176 = vpop.f32.mrb[0].mxu0
    %v1177 = vpop.f32.mrb[0].mxu0
    %v1178 = vpop.f32.mrb[0].mxu0
    %1179 = vdwg.mxu0
    %v1180 = vadd.f32 %v1175, %v136
    %v1181 = vtanh.pop %v1180
    %v1182 = vmul.f32 %v974, %v1181
    %v1184 = vrot.slane %v1182, 5
    %v1186 = vadd.f32 %v1133, %v1184
    %v1187 = vpack.c.bf16 %v1186, %v1186
    %v1189 = vshrl.u32 %v1187, 16
    %v1191 = vrot.slane %v1189, 1
    %1193 = vmatprep.subr.bf16.mxu0 %v205
    %1194 = vmatpush1.bf16.msra.mxu0 %v204
    %1195 = vmatprep.subr.bf16.mxu0 %v207
    %1196 = vmatpush1.bf16.msra.mxu0 %v206
    %1197 = vmatprep.subr.bf16.mxu0 %v209
    %1198 = vmatpush1.bf16.msra.mxu0 %v208
    %1199 = vmatprep.subr.bf16.mxu0 %v211
    %1200 = vmatpush1.bf16.msra.mxu0 %v210
    %1201 = vmatprep.subr.bf16.mxu0 %v213
    %1202 = vmatpush1.bf16.msra.mxu0 %v212
    %1203 = vmatprep.subr.bf16.mxu0 %v215
    %1204 = vmatpush1.bf16.msra.mxu0 %v214
    %1205 = vmatprep.subr.bf16.mxu0 %v217
    %1206 = vmatpush1.bf16.msra.mxu0 %v216
    %1207 = vmatprep.subr.bf16.mxu0 %v219
    %1208 = vmatpush1.bf16.msra.mxu0 %v218
    %1209 = vmatprep.subr.bf16.mxu0 0
    %1210 = vmatpush1.bf16.msra.mxu0 0
    %1211 = vmatprep.subr.bf16.mxu0 0
    %1212 = vmatpush1.bf16.msra.mxu0 0
    %1213 = vmatprep.subr.bf16.mxu0 0
    %1214 = vmatpush1.bf16.msra.mxu0 0
    %1215 = vmatprep.subr.bf16.mxu0 0
    %1216 = vmatpush1.bf16.msra.mxu0 0
    %1217 = vmatprep.subr.bf16.mxu0 0
    %1218 = vmatpush1.bf16.msra.mxu0 0
    %1219 = vmatprep.subr.bf16.mxu0 0
    %1220 = vmatpush1.bf16.msra.mxu0 0
    %1221 = vmatprep.subr.bf16.mxu0 0
    %1222 = vmatpush1.bf16.msra.mxu0 0
    %1223 = vmatprep.subr.bf16.mxu0 0
    %1224 = vmatpush1.bf16.msra.mxu0 0
    %1225 = vmatprep.mubr.bf16.mxu0 0
    %1226 = vmatmul.mubr.bf16.gmra.mrb[0].mxu0 %v1191
    %v1227 = vpop.f32.mrb[0].mxu0
    %v1228 = vpop.f32.mrb[0].mxu0
    %v1229 = vadd.f32 0.0, %v1228
    %v1230 = vpop.f32.mrb[0].mxu0
    %v1231 = vpop.f32.mrb[0].mxu0
    %1232 = vdwg.mxu0
    %v1234 = vrot.slane %v1229, 4
    %v1236 = vadd.f32 %v131, %v1234
    %v1237 = vtanh.pop %v1236
    %v1238 = vld [vmem:[#allocation5 + $0x5] sm:$0x1]
    %v1239 = vpack.c.bf16 %v1237, %v1237
    %v1241 = vrot.slane %v1239, 2
    %1243 = vmatprep.subr.bf16.mxu0 %v205
    %1244 = vmatpush1.bf16.msra.mxu0 %v204
    %1245 = vmatprep.subr.bf16.mxu0 %v207
    %1246 = vmatpush1.bf16.msra.mxu0 %v206
    %1247 = vmatprep.subr.bf16.mxu0 %v209
    %1248 = vmatpush1.bf16.msra.mxu0 %v208
    %1249 = vmatprep.subr.bf16.mxu0 %v211
    %1250 = vmatpush1.bf16.msra.mxu0 %v210
    %1251 = vmatprep.subr.bf16.mxu0 %v213
    %1252 = vmatpush1.bf16.msra.mxu0 %v212
    %1253 = vmatprep.subr.bf16.mxu0 %v215
    %1254 = vmatpush1.bf16.msra.mxu0 %v214
    %1255 = vmatprep.subr.bf16.mxu0 %v217
    %1256 = vmatpush1.bf16.msra.mxu0 %v216
    %1257 = vmatprep.subr.bf16.mxu0 %v219
    %1258 = vmatpush1.bf16.msra.mxu0 %v218
    %1259 = vmatprep.subr.bf16.mxu0 0
    %1260 = vmatpush1.bf16.msra.mxu0 0
    %1261 = vmatprep.subr.bf16.mxu0 0
    %1262 = vmatpush1.bf16.msra.mxu0 0
    %1263 = vmatprep.subr.bf16.mxu0 0
    %1264 = vmatpush1.bf16.msra.mxu0 0
    %1265 = vmatprep.subr.bf16.mxu0 0
    %1266 = vmatpush1.bf16.msra.mxu0 0
    %1267 = vmatprep.subr.bf16.mxu0 0
    %1268 = vmatpush1.bf16.msra.mxu0 0
    %1269 = vmatprep.subr.bf16.mxu0 0
    %1270 = vmatpush1.bf16.msra.mxu0 0
    %1271 = vmatprep.subr.bf16.mxu0 0
    %1272 = vmatpush1.bf16.msra.mxu0 0
    %1273 = vmatprep.subr.bf16.mxu0 0
    %1274 = vmatpush1.bf16.msra.mxu0 0
    %1275 = vmatprep.mubr.bf16.mxu0 0
    %1276 = vmatmul.mubr.bf16.gmra.mrb[0].mxu0 %v1241
    %v1277 = vpop.f32.mrb[0].mxu0
    %v1278 = vadd.f32 0.0, %v1277
    %v1279 = vpop.f32.mrb[0].mxu0
    %v1280 = vpop.f32.mrb[0].mxu0
    %v1281 = vpop.f32.mrb[0].mxu0
    %1282 = vdwg.mxu0
    %v1283 = vadd.f32 %v1278, %v136
    %v1284 = vtanh.pop %v1283
    %v1285 = vmul.f32 %v1238, %v1284
    %v1287 = vrot.slane %v1285, 4
    %v1289 = vadd.f32 %v1237, %v1287
    %v1290 = vpack.c.bf16 %v1289, %v1289
    %v1292 = vrot.slane %v1290, 2
    %1294 = vmatprep.subr.bf16.mxu0 %v205
    %1295 = vmatpush1.bf16.msra.mxu0 %v204
    %1296 = vmatprep.subr.bf16.mxu0 %v207
    %1297 = vmatpush1.bf16.msra.mxu0 %v206
    %1298 = vmatprep.subr.bf16.mxu0 %v209
    %1299 = vmatpush1.bf16.msra.mxu0 %v208
    %1300 = vmatprep.subr.bf16.mxu0 %v211
    %1301 = vmatpush1.bf16.msra.mxu0 %v210
    %1302 = vmatprep.subr.bf16.mxu0 %v213
    %1303 = vmatpush1.bf16.msra.mxu0 %v212
    %1304 = vmatprep.subr.bf16.mxu0 %v215
    %1305 = vmatpush1.bf16.msra.mxu0 %v214
    %1306 = vmatprep.subr.bf16.mxu0 %v217
    %1307 = vmatpush1.bf16.msra.mxu0 %v216
    %1308 = vmatprep.subr.bf16.mxu0 %v219
    %1309 = vmatpush1.bf16.msra.mxu0 %v218
    %1310 = vmatprep.subr.bf16.mxu0 0
    %1311 = vmatpush1.bf16.msra.mxu0 0
    %1312 = vmatprep.subr.bf16.mxu0 0
    %1313 = vmatpush1.bf16.msra.mxu0 0
    %1314 = vmatprep.subr.bf16.mxu0 0
    %1315 = vmatpush1.bf16.msra.mxu0 0
    %1316 = vmatprep.subr.bf16.mxu0 0
    %1317 = vmatpush1.bf16.msra.mxu0 0
    %1318 = vmatprep.subr.bf16.mxu0 0
    %1319 = vmatpush1.bf16.msra.mxu0 0
    %1320 = vmatprep.subr.bf16.mxu0 0
    %1321 = vmatpush1.bf16.msra.mxu0 0
    %1322 = vmatprep.subr.bf16.mxu0 0
    %1323 = vmatpush1.bf16.msra.mxu0 0
    %1324 = vmatprep.subr.bf16.mxu0 0
    %1325 = vmatpush1.bf16.msra.mxu0 0
    %1326 = vmatprep.mubr.bf16.mxu0 0
    %1327 = vmatmul.mubr.bf16.gmra.mrb[0].mxu0 %v1292
    %v1328 = vpop.f32.mrb[0].mxu0
    %v1329 = vadd.f32 0.0, %v1328
    %v1330 = vpop.f32.mrb[0].mxu0
    %v1331 = vpop.f32.mrb[0].mxu0
    %v1332 = vpop.f32.mrb[0].mxu0
    %1333 = vdwg.mxu0
    %v1334 = vadd.f32 %v1329, %v136
    %v1335 = vtanh.pop %v1334
    %v1336 = vmul.f32 %v1238, %v1335
    %v1338 = vrot.slane %v1336, 4
    %v1340 = vadd.f32 %v1289, %v1338
    %v1341 = vpack.c.bf16 %v1340, %v1340
    %v1343 = vrot.slane %v1341, 2
    %1345 = vmatprep.subr.bf16.mxu0 %v205
    %1346 = vmatpush1.bf16.msra.mxu0 %v204
    %1347 = vmatprep.subr.bf16.mxu0 %v207
    %1348 = vmatpush1.bf16.msra.mxu0 %v206
    %1349 = vmatprep.subr.bf16.mxu0 %v209
    %1350 = vmatpush1.bf16.msra.mxu0 %v208
    %1351 = vmatprep.subr.bf16.mxu0 %v211
    %1352 = vmatpush1.bf16.msra.mxu0 %v210
    %1353 = vmatprep.subr.bf16.mxu0 %v213
    %1354 = vmatpush1.bf16.msra.mxu0 %v212
    %1355 = vmatprep.subr.bf16.mxu0 %v215
    %1356 = vmatpush1.bf16.msra.mxu0 %v214
    %1357 = vmatprep.subr.bf16.mxu0 %v217
    %1358 = vmatpush1.bf16.msra.mxu0 %v216
    %1359 = vmatprep.subr.bf16.mxu0 %v219
    %1360 = vmatpush1.bf16.msra.mxu0 %v218
    %1361 = vmatprep.subr.bf16.mxu0 0
    %1362 = vmatpush1.bf16.msra.mxu0 0
    %1363 = vmatprep.subr.bf16.mxu0 0
    %1364 = vmatpush1.bf16.msra.mxu0 0
    %1365 = vmatprep.subr.bf16.mxu0 0
    %1366 = vmatpush1.bf16.msra.mxu0 0
    %1367 = vmatprep.subr.bf16.mxu0 0
    %1368 = vmatpush1.bf16.msra.mxu0 0
    %1369 = vmatprep.subr.bf16.mxu0 0
    %1370 = vmatpush1.bf16.msra.mxu0 0
    %1371 = vmatprep.subr.bf16.mxu0 0
    %1372 = vmatpush1.bf16.msra.mxu0 0
    %1373 = vmatprep.subr.bf16.mxu0 0
    %1374 = vmatpush1.bf16.msra.mxu0 0
    %1375 = vmatprep.subr.bf16.mxu0 0
    %1376 = vmatpush1.bf16.msra.mxu0 0
    %1377 = vmatprep.mubr.bf16.mxu0 0
    %1378 = vmatmul.mubr.bf16.gmra.mrb[0].mxu0 %v1343
    %v1379 = vpop.f32.mrb[0].mxu0
    %v1380 = vadd.f32 0.0, %v1379
    %v1381 = vpop.f32.mrb[0].mxu0
    %v1382 = vpop.f32.mrb[0].mxu0
    %v1383 = vpop.f32.mrb[0].mxu0
    %1384 = vdwg.mxu0
    %v1385 = vadd.f32 %v1380, %v136
    %v1386 = vtanh.pop %v1385
    %v1387 = vmul.f32 %v1238, %v1386
    %v1389 = vrot.slane %v1387, 4
    %v1391 = vadd.f32 %v1340, %v1389
    %v1392 = vpack.c.bf16 %v1391, %v1391
    %v1394 = vrot.slane %v1392, 2
    %1396 = vmatprep.subr.bf16.mxu0 %v205
    %1397 = vmatpush1.bf16.msra.mxu0 %v204
    %1398 = vmatprep.subr.bf16.mxu0 %v207
    %1399 = vmatpush1.bf16.msra.mxu0 %v206
    %1400 = vmatprep.subr.bf16.mxu0 %v209
    %1401 = vmatpush1.bf16.msra.mxu0 %v208
    %1402 = vmatprep.subr.bf16.mxu0 %v211
    %1403 = vmatpush1.bf16.msra.mxu0 %v210
    %1404 = vmatprep.subr.bf16.mxu0 %v213
    %1405 = vmatpush1.bf16.msra.mxu0 %v212
    %1406 = vmatprep.subr.bf16.mxu0 %v215
    %1407 = vmatpush1.bf16.msra.mxu0 %v214
    %1408 = vmatprep.subr.bf16.mxu0 %v217
    %1409 = vmatpush1.bf16.msra.mxu0 %v216
    %1410 = vmatprep.subr.bf16.mxu0 %v219
    %1411 = vmatpush1.bf16.msra.mxu0 %v218
    %1412 = vmatprep.subr.bf16.mxu0 0
    %1413 = vmatpush1.bf16.msra.mxu0 0
    %1414 = vmatprep.subr.bf16.mxu0 0
    %1415 = vmatpush1.bf16.msra.mxu0 0
    %1416 = vmatprep.subr.bf16.mxu0 0
    %1417 = vmatpush1.bf16.msra.mxu0 0
    %1418 = vmatprep.subr.bf16.mxu0 0
    %1419 = vmatpush1.bf16.msra.mxu0 0
    %1420 = vmatprep.subr.bf16.mxu0 0
    %1421 = vmatpush1.bf16.msra.mxu0 0
    %1422 = vmatprep.subr.bf16.mxu0 0
    %1423 = vmatpush1.bf16.msra.mxu0 0
    %1424 = vmatprep.subr.bf16.mxu0 0
    %1425 = vmatpush1.bf16.msra.mxu0 0
    %1426 = vmatprep.subr.bf16.mxu0 0
    %1427 = vmatpush1.bf16.msra.mxu0 0
    %1428 = vmatprep.mubr.bf16.mxu0 0
    %1429 = vmatmul.mubr.bf16.gmra.mrb[0].mxu0 %v1394
    %v1430 = vpop.f32.mrb[0].mxu0
    %v1431 = vadd.f32 0.0, %v1430
    %v1432 = vpop.f32.mrb[0].mxu0
    %v1433 = vpop.f32.mrb[0].mxu0
    %v1434 = vpop.f32.mrb[0].mxu0
    %1435 = vdwg.mxu0
    %v1436 = vadd.f32 %v1431, %v136
    %v1437 = vtanh.pop %v1436
    %v1438 = vmul.f32 %v1238, %v1437
    %v1440 = vrot.slane %v1438, 4
    %v1442 = vadd.f32 %v1391, %v1440
    %v1443 = vpack.c.bf16 %v1442, %v1442
    %v1445 = vrot.slane %v1443, 2
    %1447 = vmatprep.subr.bf16.mxu0 %v205
    %1448 = vmatpush1.bf16.msra.mxu0 %v204
    %1449 = vmatprep.subr.bf16.mxu0 %v207
    %1450 = vmatpush1.bf16.msra.mxu0 %v206
    %1451 = vmatprep.subr.bf16.mxu0 %v209
    %1452 = vmatpush1.bf16.msra.mxu0 %v208
    %1453 = vmatprep.subr.bf16.mxu0 %v211
    %1454 = vmatpush1.bf16.msra.mxu0 %v210
    %1455 = vmatprep.subr.bf16.mxu0 %v213
    %1456 = vmatpush1.bf16.msra.mxu0 %v212
    %1457 = vmatprep.subr.bf16.mxu0 %v215
    %1458 = vmatpush1.bf16.msra.mxu0 %v214
    %1459 = vmatprep.subr.bf16.mxu0 %v217
    %1460 = vmatpush1.bf16.msra.mxu0 %v216
    %1461 = vmatprep.subr.bf16.mxu0 %v219
    %1462 = vmatpush1.bf16.msra.mxu0 %v218
    %1463 = vmatprep.subr.bf16.mxu0 0
    %1464 = vmatpush1.bf16.msra.mxu0 0
    %1465 = vmatprep.subr.bf16.mxu0 0
    %1466 = vmatpush1.bf16.msra.mxu0 0
    %1467 = vmatprep.subr.bf16.mxu0 0
    %1468 = vmatpush1.bf16.msra.mxu0 0
    %1469 = vmatprep.subr.bf16.mxu0 0
    %1470 = vmatpush1.bf16.msra.mxu0 0
    %1471 = vmatprep.subr.bf16.mxu0 0
    %1472 = vmatpush1.bf16.msra.mxu0 0
    %1473 = vmatprep.subr.bf16.mxu0 0
    %1474 = vmatpush1.bf16.msra.mxu0 0
    %1475 = vmatprep.subr.bf16.mxu0 0
    %1476 = vmatpush1.bf16.msra.mxu0 0
    %1477 = vmatprep.subr.bf16.mxu0 0
    %1478 = vmatpush1.bf16.msra.mxu0 0
    %1479 = vmatprep.mubr.bf16.mxu0 0
    %1480 = vmatmul.mubr.bf16.gmra.mrb[0].mxu0 %v1445
    %v1481 = vpop.f32.mrb[0].mxu0
    %v1482 = vpop.f32.mrb[0].mxu0
    %v1483 = vadd.f32 0.0, %v1482
    %v1484 = vpop.f32.mrb[0].mxu0
    %v1485 = vpop.f32.mrb[0].mxu0
    %1486 = vdwg.mxu0
    %v1488 = vrot.slane %v1483, 3
    %v1490 = vadd.f32 %v131, %v1488
    %v1491 = vtanh.pop %v1490
    %v1492 = vld [vmem:[#allocation5 + $0x6] sm:$0x1]
    %v1493 = vpack.c.bf16 %v1491, %v1491
    %v1495 = vshrl.u32 %v1493, 16
    %v1497 = vrot.slane %v1495, 2
    %1499 = vmatprep.subr.bf16.mxu0 %v205
    %1500 = vmatpush1.bf16.msra.mxu0 %v204
    %1501 = vmatprep.subr.bf16.mxu0 %v207
    %1502 = vmatpush1.bf16.msra.mxu0 %v206
    %1503 = vmatprep.subr.bf16.mxu0 %v209
    %1504 = vmatpush1.bf16.msra.mxu0 %v208
    %1505 = vmatprep.subr.bf16.mxu0 %v211
    %1506 = vmatpush1.bf16.msra.mxu0 %v210
    %1507 = vmatprep.subr.bf16.mxu0 %v213
    %1508 = vmatpush1.bf16.msra.mxu0 %v212
    %1509 = vmatprep.subr.bf16.mxu0 %v215
    %1510 = vmatpush1.bf16.msra.mxu0 %v214
    %1511 = vmatprep.subr.bf16.mxu0 %v217
    %1512 = vmatpush1.bf16.msra.mxu0 %v216
    %1513 = vmatprep.subr.bf16.mxu0 %v219
    %1514 = vmatpush1.bf16.msra.mxu0 %v218
    %1515 = vmatprep.subr.bf16.mxu0 0
    %1516 = vmatpush1.bf16.msra.mxu0 0
    %1517 = vmatprep.subr.bf16.mxu0 0
    %1518 = vmatpush1.bf16.msra.mxu0 0
    %1519 = vmatprep.subr.bf16.mxu0 0
    %1520 = vmatpush1.bf16.msra.mxu0 0
    %1521 = vmatprep.subr.bf16.mxu0 0
    %1522 = vmatpush1.bf16.msra.mxu0 0
    %1523 = vmatprep.subr.bf16.mxu0 0
    %1524 = vmatpush1.bf16.msra.mxu0 0
    %1525 = vmatprep.subr.bf16.mxu0 0
    %1526 = vmatpush1.bf16.msra.mxu0 0
    %1527 = vmatprep.subr.bf16.mxu0 0
    %1528 = vmatpush1.bf16.msra.mxu0 0
    %1529 = vmatprep.subr.bf16.mxu0 0
    %1530 = vmatpush1.bf16.msra.mxu0 0
    %1531 = vmatprep.mubr.bf16.mxu0 0
    %1532 = vmatmul.mubr.bf16.gmra.mrb[0].mxu0 %v1497
    %v1533 = vpop.f32.mrb[0].mxu0
    %v1534 = vadd.f32 0.0, %v1533
    %v1535 = vpop.f32.mrb[0].mxu0
    %v1536 = vpop.f32.mrb[0].mxu0
    %v1537 = vpop.f32.mrb[0].mxu0
    %1538 = vdwg.mxu0
    %v1539 = vadd.f32 %v1534, %v136
    %v1540 = vtanh.pop %v1539
    %v1541 = vmul.f32 %v1492, %v1540
    %v1543 = vrot.slane %v1541, 3
    %v1545 = vadd.f32 %v1491, %v1543
    %v1546 = vpack.c.bf16 %v1545, %v1545
    %v1548 = vshrl.u32 %v1546, 16
    %v1550 = vrot.slane %v1548, 2
    %1552 = vmatprep.subr.bf16.mxu0 %v205
    %1553 = vmatpush1.bf16.msra.mxu0 %v204
    %1554 = vmatprep.subr.bf16.mxu0 %v207
    %1555 = vmatpush1.bf16.msra.mxu0 %v206
    %1556 = vmatprep.subr.bf16.mxu0 %v209
    %1557 = vmatpush1.bf16.msra.mxu0 %v208
    %1558 = vmatprep.subr.bf16.mxu0 %v211
    %1559 = vmatpush1.bf16.msra.mxu0 %v210
    %1560 = vmatprep.subr.bf16.mxu0 %v213
    %1561 = vmatpush1.bf16.msra.mxu0 %v212
    %1562 = vmatprep.subr.bf16.mxu0 %v215
    %1563 = vmatpush1.bf16.msra.mxu0 %v214
    %1564 = vmatprep.subr.bf16.mxu0 %v217
    %1565 = vmatpush1.bf16.msra.mxu0 %v216
    %1566 = vmatprep.subr.bf16.mxu0 %v219
    %1567 = vmatpush1.bf16.msra.mxu0 %v218
    %1568 = vmatprep.subr.bf16.mxu0 0
    %1569 = vmatpush1.bf16.msra.mxu0 0
    %1570 = vmatprep.subr.bf16.mxu0 0
    %1571 = vmatpush1.bf16.msra.mxu0 0
    %1572 = vmatprep.subr.bf16.mxu0 0
    %1573 = vmatpush1.bf16.msra.mxu0 0
    %1574 = vmatprep.subr.bf16.mxu0 0
    %1575 = vmatpush1.bf16.msra.mxu0 0
    %1576 = vmatprep.subr.bf16.mxu0 0
    %1577 = vmatpush1.bf16.msra.mxu0 0
    %1578 = vmatprep.subr.bf16.mxu0 0
    %1579 = vmatpush1.bf16.msra.mxu0 0
    %1580 = vmatprep.subr.bf16.mxu0 0
    %1581 = vmatpush1.bf16.msra.mxu0 0
    %1582 = vmatprep.subr.bf16.mxu0 0
    %1583 = vmatpush1.bf16.msra.mxu0 0
    %1584 = vmatprep.mubr.bf16.mxu0 0
    %1585 = vmatmul.mubr.bf16.gmra.mrb[0].mxu0 %v1550
    %v1586 = vpop.f32.mrb[0].mxu0
    %v1587 = vadd.f32 0.0, %v1586
    %v1588 = vpop.f32.mrb[0].mxu0
    %v1589 = vpop.f32.mrb[0].mxu0
    %v1590 = vpop.f32.mrb[0].mxu0
    %1591 = vdwg.mxu0
    %v1592 = vadd.f32 %v1587, %v136
    %v1593 = vtanh.pop %v1592
    %v1594 = vmul.f32 %v1492, %v1593
    %v1596 = vrot.slane %v1594, 3
    %v1598 = vadd.f32 %v1545, %v1596
    %v1599 = vpack.c.bf16 %v1598, %v1598
    %v1601 = vshrl.u32 %v1599, 16
    %v1603 = vrot.slane %v1601, 2
    %1605 = vmatprep.subr.bf16.mxu0 %v205
    %1606 = vmatpush1.bf16.msra.mxu0 %v204
    %1607 = vmatprep.subr.bf16.mxu0 %v207
    %1608 = vmatpush1.bf16.msra.mxu0 %v206
    %1609 = vmatprep.subr.bf16.mxu0 %v209
    %1610 = vmatpush1.bf16.msra.mxu0 %v208
    %1611 = vmatprep.subr.bf16.mxu0 %v211
    %1612 = vmatpush1.bf16.msra.mxu0 %v210
    %1613 = vmatprep.subr.bf16.mxu0 %v213
    %1614 = vmatpush1.bf16.msra.mxu0 %v212
    %1615 = vmatprep.subr.bf16.mxu0 %v215
    %1616 = vmatpush1.bf16.msra.mxu0 %v214
    %1617 = vmatprep.subr.bf16.mxu0 %v217
    %1618 = vmatpush1.bf16.msra.mxu0 %v216
    %1619 = vmatprep.subr.bf16.mxu0 %v219
    %1620 = vmatpush1.bf16.msra.mxu0 %v218
    %1621 = vmatprep.subr.bf16.mxu0 0
    %1622 = vmatpush1.bf16.msra.mxu0 0
    %1623 = vmatprep.subr.bf16.mxu0 0
    %1624 = vmatpush1.bf16.msra.mxu0 0
    %1625 = vmatprep.subr.bf16.mxu0 0
    %1626 = vmatpush1.bf16.msra.mxu0 0
    %1627 = vmatprep.subr.bf16.mxu0 0
    %1628 = vmatpush1.bf16.msra.mxu0 0
    %1629 = vmatprep.subr.bf16.mxu0 0
    %1630 = vmatpush1.bf16.msra.mxu0 0
    %1631 = vmatprep.subr.bf16.mxu0 0
    %1632 = vmatpush1.bf16.msra.mxu0 0
    %1633 = vmatprep.subr.bf16.mxu0 0
    %1634 = vmatpush1.bf16.msra.mxu0 0
    %1635 = vmatprep.subr.bf16.mxu0 0
    %1636 = vmatpush1.bf16.msra.mxu0 0
    %1637 = vmatprep.mubr.bf16.mxu0 0
    %1638 = vmatmul.mubr.bf16.gmra.mrb[0].mxu0 %v1603
    %v1639 = vpop.f32.mrb[0].mxu0
    %v1640 = vadd.f32 0.0, %v1639
    %v1641 = vpop.f32.mrb[0].mxu0
    %v1642 = vpop.f32.mrb[0].mxu0
    %v1643 = vpop.f32.mrb[0].mxu0
    %1644 = vdwg.mxu0
    %v1645 = vadd.f32 %v1640, %v136
    %v1646 = vtanh.pop %v1645
    %v1647 = vmul.f32 %v1492, %v1646
    %v1649 = vrot.slane %v1647, 3
    %v1651 = vadd.f32 %v1598, %v1649
    %v1652 = vpack.c.bf16 %v1651, %v1651
    %v1654 = vshrl.u32 %v1652, 16
    %v1656 = vrot.slane %v1654, 2
    %1658 = vmatprep.subr.bf16.mxu0 %v205
    %1659 = vmatpush1.bf16.msra.mxu0 %v204
    %1660 = vmatprep.subr.bf16.mxu0 %v207
    %1661 = vmatpush1.bf16.msra.mxu0 %v206
    %1662 = vmatprep.subr.bf16.mxu0 %v209
    %1663 = vmatpush1.bf16.msra.mxu0 %v208
    %1664 = vmatprep.subr.bf16.mxu0 %v211
    %1665 = vmatpush1.bf16.msra.mxu0 %v210
    %1666 = vmatprep.subr.bf16.mxu0 %v213
    %1667 = vmatpush1.bf16.msra.mxu0 %v212
    %1668 = vmatprep.subr.bf16.mxu0 %v215
    %1669 = vmatpush1.bf16.msra.mxu0 %v214
    %1670 = vmatprep.subr.bf16.mxu0 %v217
    %1671 = vmatpush1.bf16.msra.mxu0 %v216
    %1672 = vmatprep.subr.bf16.mxu0 %v219
    %1673 = vmatpush1.bf16.msra.mxu0 %v218
    %1674 = vmatprep.subr.bf16.mxu0 0
    %1675 = vmatpush1.bf16.msra.mxu0 0
    %1676 = vmatprep.subr.bf16.mxu0 0
    %1677 = vmatpush1.bf16.msra.mxu0 0
    %1678 = vmatprep.subr.bf16.mxu0 0
    %1679 = vmatpush1.bf16.msra.mxu0 0
    %1680 = vmatprep.subr.bf16.mxu0 0
    %1681 = vmatpush1.bf16.msra.mxu0 0
    %1682 = vmatprep.subr.bf16.mxu0 0
    %1683 = vmatpush1.bf16.msra.mxu0 0
    %1684 = vmatprep.subr.bf16.mxu0 0
    %1685 = vmatpush1.bf16.msra.mxu0 0
    %1686 = vmatprep.subr.bf16.mxu0 0
    %1687 = vmatpush1.bf16.msra.mxu0 0
    %1688 = vmatprep.subr.bf16.mxu0 0
    %1689 = vmatpush1.bf16.msra.mxu0 0
    %1690 = vmatprep.mubr.bf16.mxu0 0
    %1691 = vmatmul.mubr.bf16.gmra.mrb[0].mxu0 %v1656
    %v1692 = vpop.f32.mrb[0].mxu0
    %v1693 = vadd.f32 0.0, %v1692
    %v1694 = vpop.f32.mrb[0].mxu0
    %v1695 = vpop.f32.mrb[0].mxu0
    %v1696 = vpop.f32.mrb[0].mxu0
    %1697 = vdwg.mxu0
    %v1698 = vadd.f32 %v1693, %v136
    %v1699 = vtanh.pop %v1698
    %v1700 = vmul.f32 %v1492, %v1699
    %v1702 = vrot.slane %v1700, 3
    %v1704 = vadd.f32 %v1651, %v1702
    %v1705 = vpack.c.bf16 %v1704, %v1704
    %v1707 = vshrl.u32 %v1705, 16
    %v1709 = vrot.slane %v1707, 2
    %1711 = vmatprep.subr.bf16.mxu0 %v205
    %1712 = vmatpush1.bf16.msra.mxu0 %v204
    %1713 = vmatprep.subr.bf16.mxu0 %v207
    %1714 = vmatpush1.bf16.msra.mxu0 %v206
    %1715 = vmatprep.subr.bf16.mxu0 %v209
    %1716 = vmatpush1.bf16.msra.mxu0 %v208
    %1717 = vmatprep.subr.bf16.mxu0 %v211
    %1718 = vmatpush1.bf16.msra.mxu0 %v210
    %1719 = vmatprep.subr.bf16.mxu0 %v213
    %1720 = vmatpush1.bf16.msra.mxu0 %v212
    %1721 = vmatprep.subr.bf16.mxu0 %v215
    %1722 = vmatpush1.bf16.msra.mxu0 %v214
    %1723 = vmatprep.subr.bf16.mxu0 %v217
    %1724 = vmatpush1.bf16.msra.mxu0 %v216
    %1725 = vmatprep.subr.bf16.mxu0 %v219
    %1726 = vmatpush1.bf16.msra.mxu0 %v218
    %1727 = vmatprep.subr.bf16.mxu0 0
    %1728 = vmatpush1.bf16.msra.mxu0 0
    %1729 = vmatprep.subr.bf16.mxu0 0
    %1730 = vmatpush1.bf16.msra.mxu0 0
    %1731 = vmatprep.subr.bf16.mxu0 0
    %1732 = vmatpush1.bf16.msra.mxu0 0
    %1733 = vmatprep.subr.bf16.mxu0 0
    %1734 = vmatpush1.bf16.msra.mxu0 0
    %1735 = vmatprep.subr.bf16.mxu0 0
    %1736 = vmatpush1.bf16.msra.mxu0 0
    %1737 = vmatprep.subr.bf16.mxu0 0
    %1738 = vmatpush1.bf16.msra.mxu0 0
    %1739 = vmatprep.subr.bf16.mxu0 0
    %1740 = vmatpush1.bf16.msra.mxu0 0
    %1741 = vmatprep.subr.bf16.mxu0 0
    %1742 = vmatpush1.bf16.msra.mxu0 0
    %1743 = vmatprep.mubr.bf16.mxu0 0
    %1744 = vmatmul.mubr.bf16.gmra.mrb[0].mxu0 %v1709
    %v1745 = vpop.f32.mrb[0].mxu0
    %v1746 = vpop.f32.mrb[0].mxu0
    %v1747 = vadd.f32 0.0, %v1746
    %v1748 = vpop.f32.mrb[0].mxu0
    %v1749 = vpop.f32.mrb[0].mxu0
    %1750 = vdwg.mxu0
    %v1752 = vrot.slane %v1747, 2
    %v1754 = vadd.f32 %v131, %v1752
    %v1755 = vtanh.pop %v1754
    %v1756 = vld [vmem:[#allocation5 + $0x7] sm:$0x1]
    %v1757 = vpack.c.bf16 %v1755, %v1755
    %v1759 = vrot.slane %v1757, 3
    %1761 = vmatprep.subr.bf16.mxu0 %v205
    %1762 = vmatpush1.bf16.msra.mxu0 %v204
    %1763 = vmatprep.subr.bf16.mxu0 %v207
    %1764 = vmatpush1.bf16.msra.mxu0 %v206
    %1765 = vmatprep.subr.bf16.mxu0 %v209
    %1766 = vmatpush1.bf16.msra.mxu0 %v208
    %1767 = vmatprep.subr.bf16.mxu0 %v211
    %1768 = vmatpush1.bf16.msra.mxu0 %v210
    %1769 = vmatprep.subr.bf16.mxu0 %v213
    %1770 = vmatpush1.bf16.msra.mxu0 %v212
    %1771 = vmatprep.subr.bf16.mxu0 %v215
    %1772 = vmatpush1.bf16.msra.mxu0 %v214
    %1773 = vmatprep.subr.bf16.mxu0 %v217
    %1774 = vmatpush1.bf16.msra.mxu0 %v216
    %1775 = vmatprep.subr.bf16.mxu0 %v219
    %1776 = vmatpush1.bf16.msra.mxu0 %v218
    %1777 = vmatprep.subr.bf16.mxu0 0
    %1778 = vmatpush1.bf16.msra.mxu0 0
    %1779 = vmatprep.subr.bf16.mxu0 0
    %1780 = vmatpush1.bf16.msra.mxu0 0
    %1781 = vmatprep.subr.bf16.mxu0 0
    %1782 = vmatpush1.bf16.msra.mxu0 0
    %1783 = vmatprep.subr.bf16.mxu0 0
    %1784 = vmatpush1.bf16.msra.mxu0 0
    %1785 = vmatprep.subr.bf16.mxu0 0
    %1786 = vmatpush1.bf16.msra.mxu0 0
    %1787 = vmatprep.subr.bf16.mxu0 0
    %1788 = vmatpush1.bf16.msra.mxu0 0
    %1789 = vmatprep.subr.bf16.mxu0 0
    %1790 = vmatpush1.bf16.msra.mxu0 0
    %1791 = vmatprep.subr.bf16.mxu0 0
    %1792 = vmatpush1.bf16.msra.mxu0 0
    %1793 = vmatprep.mubr.bf16.mxu0 0
    %1794 = vmatmul.mubr.bf16.gmra.mrb[0].mxu0 %v1759
    %v1795 = vpop.f32.mrb[0].mxu0
    %v1796 = vadd.f32 0.0, %v1795
    %v1797 = vpop.f32.mrb[0].mxu0
    %v1798 = vpop.f32.mrb[0].mxu0
    %v1799 = vpop.f32.mrb[0].mxu0
    %1800 = vdwg.mxu0
    %v1801 = vadd.f32 %v1796, %v136
    %v1802 = vtanh.pop %v1801
    %v1803 = vmul.f32 %v1756, %v1802
    %v1805 = vrot.slane %v1803, 2
    %v1807 = vadd.f32 %v1755, %v1805
    %v1808 = vpack.c.bf16 %v1807, %v1807
    %v1810 = vrot.slane %v1808, 3
    %1812 = vmatprep.subr.bf16.mxu0 %v205
    %1813 = vmatpush1.bf16.msra.mxu0 %v204
    %1814 = vmatprep.subr.bf16.mxu0 %v207
    %1815 = vmatpush1.bf16.msra.mxu0 %v206
    %1816 = vmatprep.subr.bf16.mxu0 %v209
    %1817 = vmatpush1.bf16.msra.mxu0 %v208
    %1818 = vmatprep.subr.bf16.mxu0 %v211
    %1819 = vmatpush1.bf16.msra.mxu0 %v210
    %1820 = vmatprep.subr.bf16.mxu0 %v213
    %1821 = vmatpush1.bf16.msra.mxu0 %v212
    %1822 = vmatprep.subr.bf16.mxu0 %v215
    %1823 = vmatpush1.bf16.msra.mxu0 %v214
    %1824 = vmatprep.subr.bf16.mxu0 %v217
    %1825 = vmatpush1.bf16.msra.mxu0 %v216
    %1826 = vmatprep.subr.bf16.mxu0 %v219
    %1827 = vmatpush1.bf16.msra.mxu0 %v218
    %1828 = vmatprep.subr.bf16.mxu0 0
    %1829 = vmatpush1.bf16.msra.mxu0 0
    %1830 = vmatprep.subr.bf16.mxu0 0
    %1831 = vmatpush1.bf16.msra.mxu0 0
    %1832 = vmatprep.subr.bf16.mxu0 0
    %1833 = vmatpush1.bf16.msra.mxu0 0
    %1834 = vmatprep.subr.bf16.mxu0 0
    %1835 = vmatpush1.bf16.msra.mxu0 0
    %1836 = vmatprep.subr.bf16.mxu0 0
    %1837 = vmatpush1.bf16.msra.mxu0 0
    %1838 = vmatprep.subr.bf16.mxu0 0
    %1839 = vmatpush1.bf16.msra.mxu0 0
    %1840 = vmatprep.subr.bf16.mxu0 0
    %1841 = vmatpush1.bf16.msra.mxu0 0
    %1842 = vmatprep.subr.bf16.mxu0 0
    %1843 = vmatpush1.bf16.msra.mxu0 0
    %1844 = vmatprep.mubr.bf16.mxu0 0
    %1845 = vmatmul.mubr.bf16.gmra.mrb[0].mxu0 %v1810
    %v1846 = vpop.f32.mrb[0].mxu0
    %v1847 = vadd.f32 0.0, %v1846
    %v1848 = vpop.f32.mrb[0].mxu0
    %v1849 = vpop.f32.mrb[0].mxu0
    %v1850 = vpop.f32.mrb[0].mxu0
    %1851 = vdwg.mxu0
    %v1852 = vadd.f32 %v1847, %v136
    %v1853 = vtanh.pop %v1852
    %v1854 = vmul.f32 %v1756, %v1853
    %v1856 = vrot.slane %v1854, 2
    %v1858 = vadd.f32 %v1807, %v1856
    %v1859 = vpack.c.bf16 %v1858, %v1858
    %v1861 = vrot.slane %v1859, 3
    %1863 = vmatprep.subr.bf16.mxu0 %v205
    %1864 = vmatpush1.bf16.msra.mxu0 %v204
    %1865 = vmatprep.subr.bf16.mxu0 %v207
    %1866 = vmatpush1.bf16.msra.mxu0 %v206
    %1867 = vmatprep.subr.bf16.mxu0 %v209
    %1868 = vmatpush1.bf16.msra.mxu0 %v208
    %1869 = vmatprep.subr.bf16.mxu0 %v211
    %1870 = vmatpush1.bf16.msra.mxu0 %v210
    %1871 = vmatprep.subr.bf16.mxu0 %v213
    %1872 = vmatpush1.bf16.msra.mxu0 %v212
    %1873 = vmatprep.subr.bf16.mxu0 %v215
    %1874 = vmatpush1.bf16.msra.mxu0 %v214
    %1875 = vmatprep.subr.bf16.mxu0 %v217
    %1876 = vmatpush1.bf16.msra.mxu0 %v216
    %1877 = vmatprep.subr.bf16.mxu0 %v219
    %1878 = vmatpush1.bf16.msra.mxu0 %v218
    %1879 = vmatprep.subr.bf16.mxu0 0
    %1880 = vmatpush1.bf16.msra.mxu0 0
    %1881 = vmatprep.subr.bf16.mxu0 0
    %1882 = vmatpush1.bf16.msra.mxu0 0
    %1883 = vmatprep.subr.bf16.mxu0 0
    %1884 = vmatpush1.bf16.msra.mxu0 0
    %1885 = vmatprep.subr.bf16.mxu0 0
    %1886 = vmatpush1.bf16.msra.mxu0 0
    %1887 = vmatprep.subr.bf16.mxu0 0
    %1888 = vmatpush1.bf16.msra.mxu0 0
    %1889 = vmatprep.subr.bf16.mxu0 0
    %1890 = vmatpush1.bf16.msra.mxu0 0
    %1891 = vmatprep.subr.bf16.mxu0 0
    %1892 = vmatpush1.bf16.msra.mxu0 0
    %1893 = vmatprep.subr.bf16.mxu0 0
    %1894 = vmatpush1.bf16.msra.mxu0 0
    %1895 = vmatprep.mubr.bf16.mxu0 0
    %1896 = vmatmul.mubr.bf16.gmra.mrb[0].mxu0 %v1861
    %v1897 = vpop.f32.mrb[0].mxu0
    %v1898 = vadd.f32 0.0, %v1897
    %v1899 = vpop.f32.mrb[0].mxu0
    %v1900 = vpop.f32.mrb[0].mxu0
    %v1901 = vpop.f32.mrb[0].mxu0
    %1902 = vdwg.mxu0
    %v1903 = vadd.f32 %v1898, %v136
    %v1904 = vtanh.pop %v1903
    %v1905 = vmul.f32 %v1756, %v1904
    %v1907 = vrot.slane %v1905, 2
    %v1909 = vadd.f32 %v1858, %v1907
    %v1910 = vpack.c.bf16 %v1909, %v1909
    %v1912 = vrot.slane %v1910, 3
    %1914 = vmatprep.subr.bf16.mxu0 %v205
    %1915 = vmatpush1.bf16.msra.mxu0 %v204
    %1916 = vmatprep.subr.bf16.mxu0 %v207
    %1917 = vmatpush1.bf16.msra.mxu0 %v206
    %1918 = vmatprep.subr.bf16.mxu0 %v209
    %1919 = vmatpush1.bf16.msra.mxu0 %v208
    %1920 = vmatprep.subr.bf16.mxu0 %v211
    %1921 = vmatpush1.bf16.msra.mxu0 %v210
    %1922 = vmatprep.subr.bf16.mxu0 %v213
    %1923 = vmatpush1.bf16.msra.mxu0 %v212
    %1924 = vmatprep.subr.bf16.mxu0 %v215
    %1925 = vmatpush1.bf16.msra.mxu0 %v214
    %1926 = vmatprep.subr.bf16.mxu0 %v217
    %1927 = vmatpush1.bf16.msra.mxu0 %v216
    %1928 = vmatprep.subr.bf16.mxu0 %v219
    %1929 = vmatpush1.bf16.msra.mxu0 %v218
    %1930 = vmatprep.subr.bf16.mxu0 0
    %1931 = vmatpush1.bf16.msra.mxu0 0
    %1932 = vmatprep.subr.bf16.mxu0 0
    %1933 = vmatpush1.bf16.msra.mxu0 0
    %1934 = vmatprep.subr.bf16.mxu0 0
    %1935 = vmatpush1.bf16.msra.mxu0 0
    %1936 = vmatprep.subr.bf16.mxu0 0
    %1937 = vmatpush1.bf16.msra.mxu0 0
    %1938 = vmatprep.subr.bf16.mxu0 0
    %1939 = vmatpush1.bf16.msra.mxu0 0
    %1940 = vmatprep.subr.bf16.mxu0 0
    %1941 = vmatpush1.bf16.msra.mxu0 0
    %1942 = vmatprep.subr.bf16.mxu0 0
    %1943 = vmatpush1.bf16.msra.mxu0 0
    %1944 = vmatprep.subr.bf16.mxu0 0
    %1945 = vmatpush1.bf16.msra.mxu0 0
    %1946 = vmatprep.mubr.bf16.mxu0 0
    %1947 = vmatmul.mubr.bf16.gmra.mrb[0].mxu0 %v1912
    %v1948 = vpop.f32.mrb[0].mxu0
    %v1949 = vadd.f32 0.0, %v1948
    %v1950 = vpop.f32.mrb[0].mxu0
    %v1951 = vpop.f32.mrb[0].mxu0
    %v1952 = vpop.f32.mrb[0].mxu0
    %1953 = vdwg.mxu0
    %v1954 = vadd.f32 %v1949, %v136
    %v1955 = vtanh.pop %v1954
    %v1956 = vmul.f32 %v1756, %v1955
    %v1958 = vrot.slane %v1956, 2
    %v1960 = vadd.f32 %v1909, %v1958
    %v1961 = vpack.c.bf16 %v1960, %v1960
    %v1963 = vrot.slane %v1961, 3
    %1965 = vmatprep.subr.bf16.mxu0 %v205
    %1966 = vmatpush1.bf16.msra.mxu0 %v204
    %1967 = vmatprep.subr.bf16.mxu0 %v207
    %1968 = vmatpush1.bf16.msra.mxu0 %v206
    %1969 = vmatprep.subr.bf16.mxu0 %v209
    %1970 = vmatpush1.bf16.msra.mxu0 %v208
    %1971 = vmatprep.subr.bf16.mxu0 %v211
    %1972 = vmatpush1.bf16.msra.mxu0 %v210
    %1973 = vmatprep.subr.bf16.mxu0 %v213
    %1974 = vmatpush1.bf16.msra.mxu0 %v212
    %1975 = vmatprep.subr.bf16.mxu0 %v215
    %1976 = vmatpush1.bf16.msra.mxu0 %v214
    %1977 = vmatprep.subr.bf16.mxu0 %v217
    %1978 = vmatpush1.bf16.msra.mxu0 %v216
    %1979 = vmatprep.subr.bf16.mxu0 %v219
    %1980 = vmatpush1.bf16.msra.mxu0 %v218
    %1981 = vmatprep.subr.bf16.mxu0 0
    %1982 = vmatpush1.bf16.msra.mxu0 0
    %1983 = vmatprep.subr.bf16.mxu0 0
    %1984 = vmatpush1.bf16.msra.mxu0 0
    %1985 = vmatprep.subr.bf16.mxu0 0
    %1986 = vmatpush1.bf16.msra.mxu0 0
    %1987 = vmatprep.subr.bf16.mxu0 0
    %1988 = vmatpush1.bf16.msra.mxu0 0
    %1989 = vmatprep.subr.bf16.mxu0 0
    %1990 = vmatpush1.bf16.msra.mxu0 0
    %1991 = vmatprep.subr.bf16.mxu0 0
    %1992 = vmatpush1.bf16.msra.mxu0 0
    %1993 = vmatprep.subr.bf16.mxu0 0
    %1994 = vmatpush1.bf16.msra.mxu0 0
    %1995 = vmatprep.subr.bf16.mxu0 0
    %1996 = vmatpush1.bf16.msra.mxu0 0
    %1997 = vmatprep.mubr.bf16.mxu0 0
    %1998 = vmatmul.mubr.bf16.gmra.mrb[0].mxu0 %v1963
    %v1999 = vpop.f32.mrb[0].mxu0
    %v2000 = vpop.f32.mrb[0].mxu0
    %v2001 = vadd.f32 0.0, %v2000
    %v2002 = vpop.f32.mrb[0].mxu0
    %v2003 = vpop.f32.mrb[0].mxu0
    %2004 = vdwg.mxu0
    %v2006 = vrot.slane %v2001, 1
    %v2008 = vadd.f32 %v131, %v2006
    %v2009 = vtanh.pop %v2008
    %2010 = vst [vmem:[#allocation10 - $0x7] sm:$0x80] %v2009
    // Predicated region
    $region42: #{tpu_custom_call.1} parent=1 // pred_check
      _
    $region43: #{tpu_custom_call.1} parent=1 // pred_check_branch
      %2012 = sbr.rel (0) target = $region45
    $region44: #{tpu_custom_call.1} parent=1 // pred_region
      %s2014 = ssub.s32 16, 16
      %2015 = vsyncadd [#allocation4], %s2014
      %s2017 = sshll.u32 [#allocation10], 4
      %s2018 = int_to_ptr.vmem [resolvable:$true] %s2017
      %2020 = dma.vmem_to_hbm [thread:$0]  %s2018, 16, %s6, [#allocation4]
    $region45: #{tpu_custom_call.1} parent=1 // pred_fallthru
      _
    // Predicated region
    $region46: #{tpu_custom_call.1} parent=1 // pred_check
      _
    $region47: #{tpu_custom_call.1} parent=1 // pred_check_branch
      %2022 = sbr.rel (0) target = $region49
    $region48: #{tpu_custom_call.1} parent=1 // pred_region
      %2023 = dma.done [#allocation4], 16
    $region49: #{tpu_custom_call.1} parent=1 // pred_fallthru
      _
    %2024 = vsyncpa [#allocation3], 1
    %2025 = vsyncpa [#allocation6], 1
    %2026 = vsyncpa [#allocation9], 1
    %2027 = vsyncpa [#allocation4], 1

</llo_original>
